<compile_context>
chip_gen: v7x
topology: tpu7x:2x2x1
jax: 0.10.0
libtpu: 0.0.40
codegen_flags: <defaults>
</compile_context>

<pallas_src>
import jax
import jax.numpy as jnp
from jax import lax
from jax.experimental import pallas as pl
from jax.experimental.pallas import tpu as pltpu


BP = 8                        # batch rows padded to one full sublane group
HP = 128                      # per-gate lane padding: gate g occupies lanes [g*HP, g*HP+H)
MATMUL_DTYPE = jnp.bfloat16   # bf16 MXU operands (f32 accumulate); jnp.float32 for exact math


# ---------------------------------------------------------------------------
# Pallas kernel: the full decoder forward in one invocation.
# ---------------------------------------------------------------------------
def _decoder_kernel(
    trg_ref,    # [T*BP, 1] int32   time-major, sublane-padded target tokens
    h0_ref,     # [BP, H]   f32     initial hidden (rows >= B are zero padding)
    table_ref,  # [Vocab, 3*HP]     embedding @ W_i, gate-aligned  (MATMUL_DTYPE)
    wh_ref,     # [H, 3*HP]         W_h, gate-aligned              (MATMUL_DTYPE)
    bx_ref,     # [1, 3*HP] f32     [b_ir+b_hr | b_iz+b_hz | b_in], gate-aligned
    bhn_ref,    # [1, H]    f32     b_hn (kept separate: scaled by reset gate)
    wo_ref,     # [H, V]            output Linear weight            (MATMUL_DTYPE)
    bo_ref,     # [1, V]    f32     output Linear bias
    preds_ref,  # out: [T*BP, V] f32  time-major logits
    hout_ref,   # out: [BP, H]   f32  final hidden state
    hs_ref,     # scratch: [T*BP, H] f32  per-step hidden states
):
    TBP = trg_ref.shape[0]
    BPk, H = h0_ref.shape
    T = TBP // BPk
    Vocab = table_ref.shape[0]
    HPg = wh_ref.shape[1] // 3          # per-gate lane stride (= HP)
    f32 = jnp.float32
    mmt = table_ref.dtype               # matmul operand dtype (bf16 or f32)

    dot = lambda a, b: jnp.dot(a, b, preferred_element_type=f32)

    # ---- Prologue: fused embedding + hoisted input projection (ONE matmul). ----
    #   xp[r] = (embedding[tok_r] @ W_i) + b_x   via one-hot @ (E @ W_i) table.
    # padding_idx=0 is handled by the zeroed embedding row (table row 0 is zero).
    tok = trg_ref[...]                                               # [T*BP, 1] i32
    onehot = (tok == lax.broadcasted_iota(jnp.int32, (TBP, Vocab), 1)).astype(mmt)
    xp = dot(onehot, table_ref[...]) + bx_ref[...]                   # [T*BP, 3*HP] f32

    wh = wh_ref[...]                                                 # [H, 3*HP]
    bhn = jnp.broadcast_to(bhn_ref[...], (BPk, H))                   # hoisted broadcast
    h = h0_ref[...]                                                  # [BP, H] f32

    # ---- Sequential GRU recurrence (statically unrolled; T is small). ----------
    for t in range(T):
        xp_t = xp[t * BPk:(t + 1) * BPk, :]                          # aligned 8-sublane slice
        hp = dot(h.astype(mmt), wh)                                  # [BP, 3*HP]  (one MXU op/step)
        # PyTorch GRU gate order (r, z, n); gate slices start at lane offsets
        # 0 / HP / 2*HP -> vreg-aligned, no lane rotates on the serial chain.
        r = jax.nn.sigmoid(xp_t[:, 0:H] + hp[:, 0:H])
        z = jax.nn.sigmoid(xp_t[:, HPg:HPg + H] + hp[:, HPg:HPg + H])
        n = jnp.tanh(xp_t[:, 2 * HPg:2 * HPg + H]
                     + r * (hp[:, 2 * HPg:2 * HPg + H] + bhn))
        h = (1.0 - z) * n + z * h                                    # [BP, H] f32
        hs_ref[t * BPk:(t + 1) * BPk, :] = h                         # aligned scratch store

    # Single final-hidden write.
    hout_ref[...] = h

    # ---- Epilogue: ONE output matmul over all T*BP rows, time-major store. -----
    logits = dot(hs_ref[...].astype(mmt), wo_ref[...]) + bo_ref[...]  # [T*BP, V]
    preds_ref[...] = logits


# ---------------------------------------------------------------------------
# One-time parameter folding/padding (hoisted out of the per-call hot path).
# ---------------------------------------------------------------------------
def prepare_decoder_params(p):
    """Fold/pad nn.Module parameters into the kernel layout (call once)."""
    H = p["w_hr"].shape[0]

    def pad_gates(blocks):
        # blocks: 3 arrays of shape [K, H] -> [K, 3*HP], each gate at a 128-lane offset.
        K = blocks[0].shape[0]
        out = jnp.zeros((K, 3 * HP), jnp.float32)
        for g, blk in enumerate(blocks):
            out = out.at[:, g * HP:g * HP + H].set(blk.astype(jnp.float32))
        return out

    emb = p["embedding"]
    # Embedding folded into the input projection: table = E @ [W_ir|W_iz|W_in].
    table = pad_gates([emb @ p["w_ir"], emb @ p["w_iz"], emb @ p["w_in"]])
    w_h = pad_gates([p["w_hr"], p["w_hz"], p["w_hn"]])
    # h-side biases for r/z folded into b_x; b_hn stays separate (scaled by r).
    b_x = pad_gates([p["b_ir"] + p["b_hr"], p["b_iz"] + p["b_hz"], p["b_in"]])

    return {
        "table": table.astype(MATMUL_DTYPE),        # [Vocab, 3*HP]
        "w_h":   w_h.astype(MATMUL_DTYPE),          # [H, 3*HP]
        "b_x":   b_x,                               # [1, 3*HP] f32
        "b_hn":  p["b_hn"].astype(jnp.float32),     # [1, H]    f32
        "w_out": p["w_out"].astype(MATMUL_DTYPE),   # [H, V]
        "b_out": p["b_out"].astype(jnp.float32),    # [1, V]    f32
    }


# ---------------------------------------------------------------------------
# Wrapper: matches Decoder.forward's batch-first API.
# ---------------------------------------------------------------------------
def decoder_forward(trg, hidden, kparams):
    """Pallas implementation of Decoder.forward.

    Args:
      trg:     int32   [B, T]
      hidden:  float32 [n_layers=1, B, H]
      kparams: dict from prepare_decoder_params (pre-folded/padded, computed once)
    Returns:
      preds:  float32 [B, T, V]
      hidden: float32 [1, B, H]
    """
    B, T = trg.shape
    H = kparams["b_hn"].shape[1]
    V = kparams["w_out"].shape[1]
    Vocab = kparams["table"].shape[0]
    HP3 = kparams["w_h"].shape[1]

    # Per-call input prep (tiny: 64 int32 tokens, 8x32 f32 hidden).
    trg_tm = (jnp.zeros((T, BP), jnp.int32)
              .at[:, :B].set(jnp.transpose(trg).astype(jnp.int32))
              .reshape(T * BP, 1))
    h0 = jnp.zeros((BP, H), jnp.float32).at[:B, :].set(hidden[0].astype(jnp.float32))

    # Advisory cost estimate (kernel is launch/latency bound; helps XLA scheduling).
    flops = int(2 * T * BP * (Vocab * HP3 + H * HP3 + H * V))
    transcendentals = int(3 * T * BP * H)
    bytes_accessed = int(
        trg_tm.size * 4 + h0.size * 4
        + sum(int(v.size) * v.dtype.itemsize for v in kparams.values())
        + T * BP * V * 4 + BP * H * 4)

    vmem = pl.BlockSpec(memory_space=pltpu.MemorySpace.VMEM)
    preds_tm, h_final = pl.pallas_call(
        _decoder_kernel,
        out_shape=(
            jax.ShapeDtypeStruct((T * BP, V), jnp.float32),   # time-major logits
            jax.ShapeDtypeStruct((BP, H), jnp.float32),       # final hidden (padded)
        ),
        in_specs=[vmem] * 8,
        out_specs=(vmem, vmem),
        scratch_shapes=[pltpu.VMEM((T * BP, H), jnp.float32)],
        cost_estimate=pl.CostEstimate(flops=flops,
                                      transcendentals=transcendentals,
                                      bytes_accessed=bytes_accessed),
    )(trg_tm, h0, kparams["table"], kparams["w_h"], kparams["b_x"],
      kparams["b_hn"], kparams["w_out"], kparams["b_out"])

    # Time-major -> batch-major (2 KiB, essentially free); drop sublane padding.
    preds = jnp.transpose(preds_tm.reshape(T, BP, V)[:, :B, :], (1, 0, 2))
    return preds, h_final[:B][None]


# ---------------------------------------------------------------------------
# Deterministic parameter init (synthetic; matches the nn.Module shapes).
# ---------------------------------------------------------------------------
def init_params(key, vocab_size, embed_dim, hidden_dim):
    ks = jax.random.split(key, 16)
    s_rnn = 1.0 / jnp.sqrt(hidden_dim)
    s_out = 1.0 / jnp.sqrt(hidden_dim)
    u = lambda k, shape, s: jax.random.uniform(k, shape, jnp.float32, -s, s)

    emb = jax.random.normal(ks[0], (vocab_size, embed_dim), jnp.float32)
    emb = emb.at[0].set(0.0)  # padding_idx=0

    return {
        "embedding": emb,
        # Input-to-hidden weights, stored transposed ([E, H]) for x @ W layout.
        "w_ir": u(ks[1], (embed_dim, hidden_dim), s_rnn),
        "w_iz": u(ks[2], (embed_dim, hidden_dim), s_rnn),
        "w_in": u(ks[3], (embed_dim, hidden_dim), s_rnn),
        # Hidden-to-hidden weights, stored transposed ([H, H]).
        "w_hr": u(ks[4], (hidden_dim, hidden_dim), s_rnn),
        "w_hz": u(ks[5], (hidden_dim, hidden_dim), s_rnn),
        "w_hn": u(ks[6], (hidden_dim, hidden_dim), s_rnn),
        # Biases kept 2D ([1, H]) for TPU-friendly broadcasting.
        "b_ir": u(ks[7], (1, hidden_dim), s_rnn),
        "b_iz": u(ks[8], (1, hidden_dim), s_rnn),
        "b_in": u(ks[9], (1, hidden_dim), s_rnn),
        "b_hr": u(ks[10], (1, hidden_dim), s_rnn),
        "b_hz": u(ks[11], (1, hidden_dim), s_rnn),
        "b_hn": u(ks[12], (1, hidden_dim), s_rnn),
        # Output Linear, stored transposed ([H, V]).
        "w_out": u(ks[13], (hidden_dim, vocab_size), s_out),
        "b_out": u(ks[14], (1, vocab_size), s_out),
    }


# ---------------------------------------------------------------------------
# Pure-JAX f32 reference (PyTorch GRU semantics) for correctness checking.
# ---------------------------------------------------------------------------
def decoder_reference(trg, hidden, p):
    emb = jnp.take(p["embedding"], trg, axis=0)               # [B, T, E]
    h0 = hidden[0]

    def step(h, x_t):
        r = jax.nn.sigmoid(x_t @ p["w_ir"] + p["b_ir"] + h @ p["w_hr"] + p["b_hr"])
        z = jax.nn.sigmoid(x_t @ p["w_iz"] + p["b_iz"] + h @ p["w_hz"] + p["b_hz"])
        n = jnp.tanh(x_t @ p["w_in"] + p["b_in"] + r * (h @ p["w_hn"] + p["b_hn"]))
        h_new = (1.0 - z) * n + z * h
        return h_new, h_new

    h_last, outs = lax.scan(step, h0, jnp.transpose(emb, (1, 0, 2)))
    outputs = jnp.transpose(outs, (1, 0, 2))                  # [B, T, H]
    preds = outputs @ p["w_out"] + p["b_out"]                 # [B, T, V]
    return preds, h_last[None]


if __name__ == "__main__":
    vocab_size, embed_dim, hidden_dim, n_layers = 32, 16, 32, 1
    batch, trg_len = 2, 8

    key = jax.random.PRNGKey(0)
    k_p, k_trg, k_h = jax.random.split(key, 3)

    params = init_params(k_p, vocab_size, embed_dim, hidden_dim)
    trg = jax.random.randint(k_trg, (batch, trg_len), 0, vocab_size, jnp.int32)
    hidden = jax.random.normal(k_h, (n_layers, batch, hidden_dim), jnp.float32)

    # One-time parameter fold/pad (kept out of the per-call hot path).
    kparams = prepare_decoder_params(params)

    fwd = jax.jit(decoder_forward)
    preds, h_out = fwd(trg, hidden, kparams)
    preds = jax.block_until_ready(preds)
    h_out = jax.block_until_ready(h_out)

    # Sanity check against the pure-JAX f32 reference.
    preds_ref, h_ref = decoder_reference(trg, hidden, params)
    tol = 5e-2 if MATMUL_DTYPE == jnp.bfloat16 else 1e-4  # bf16 MXU operands -> looser tol
    assert preds.shape == (batch, trg_len, vocab_size)
    assert h_out.shape == (n_layers, batch, hidden_dim)
    assert jnp.allclose(preds, preds_ref, atol=tol, rtol=tol)
    assert jnp.allclose(h_out, h_ref, atol=tol, rtol=tol)

    print("KERNEL_OK")
</pallas_src>

<mosaic_0001>
module attributes {stable_mosaic.version = 11 : i64} {
  func.func @_decoder_kernel(%arg0: memref<64x1xi32, #tpu.memory_space<vmem>>, %arg1: memref<8x32xf32, #tpu.memory_space<vmem>>, %arg2: memref<32x384xbf16, #tpu.memory_space<vmem>>, %arg3: memref<32x384xbf16, #tpu.memory_space<vmem>>, %arg4: memref<1x384xf32, #tpu.memory_space<vmem>>, %arg5: memref<1x32xf32, #tpu.memory_space<vmem>>, %arg6: memref<32x32xbf16, #tpu.memory_space<vmem>>, %arg7: memref<1x32xf32, #tpu.memory_space<vmem>>, %arg8: memref<64x32xf32, #tpu.memory_space<vmem>>, %arg9: memref<8x32xf32, #tpu.memory_space<vmem>>, %arg10: memref<64x32xf32, #tpu.memory_space<vmem>>) attributes {dimension_semantics = [], scalar_prefetch = 0 : i64, scratch_operands = 1 : i64, tpu.core_type = #tpu.core_type<tc>} {
    %c0 = arith.constant 0 : index
    %c0_0 = arith.constant 0 : index
    %0 = vector.load %arg0[%c0, %c0_0] : memref<64x1xi32, #tpu.memory_space<vmem>>, vector<64x1xi32>
    %1 = tpu.iota {dimensions = array<i32: 1>} : vector<64x32xi32>
    %2 = vector.broadcast %0 : vector<64x1xi32> to vector<64x32xi32>
    %3 = arith.cmpi eq, %2, %1 : vector<64x32xi32>
    %4 = arith.extui %3 : vector<64x32xi1> to vector<64x32xi32>
    %5 = arith.sitofp %4 : vector<64x32xi32> to vector<64x32xf32>
    %6 = arith.truncf %5 : vector<64x32xf32> to vector<64x32xbf16>
    %c0_1 = arith.constant 0 : index
    %c0_2 = arith.constant 0 : index
    %7 = vector.load %arg2[%c0_1, %c0_2] : memref<32x384xbf16, #tpu.memory_space<vmem>>, vector<32x384xbf16>
    %cst = arith.constant dense<0.000000e+00> : vector<64x384xf32>
    %8 = tpu.matmul %6, %7, %cst {dimension_numbers = #tpu.dot_dimension_numbers<[1], [0], [0], [1], [0, 0, 1, 1], [], []>} : vector<64x32xbf16>, vector<32x384xbf16>, vector<64x384xf32> -> vector<64x384xf32>
    %c0_3 = arith.constant 0 : index
    %c0_4 = arith.constant 0 : index
    %9 = vector.load %arg4[%c0_3, %c0_4] : memref<1x384xf32, #tpu.memory_space<vmem>>, vector<1x384xf32>
    %10 = vector.broadcast %9 : vector<1x384xf32> to vector<64x384xf32>
    %11 = arith.addf %8, %10 : vector<64x384xf32>
    %c0_5 = arith.constant 0 : index
    %c0_6 = arith.constant 0 : index
    %12 = vector.load %arg3[%c0_5, %c0_6] : memref<32x384xbf16, #tpu.memory_space<vmem>>, vector<32x384xbf16>
    %c0_7 = arith.constant 0 : index
    %c0_8 = arith.constant 0 : index
    %13 = vector.load %arg5[%c0_7, %c0_8] : memref<1x32xf32, #tpu.memory_space<vmem>>, vector<1x32xf32>
    %14 = vector.shape_cast %13 : vector<1x32xf32> to vector<1x32xf32>
    %15 = vector.broadcast %14 : vector<1x32xf32> to vector<8x32xf32>
    %c0_9 = arith.constant 0 : index
    %c0_10 = arith.constant 0 : index
    %16 = vector.load %arg1[%c0_9, %c0_10] : memref<8x32xf32, #tpu.memory_space<vmem>>, vector<8x32xf32>
    %17 = vector.extract_strided_slice %11 {offsets = [0, 0], sizes = [8, 384], strides = [1, 1]} : vector<64x384xf32> to vector<8x384xf32>
    %18 = arith.truncf %16 : vector<8x32xf32> to vector<8x32xbf16>
    %cst_11 = arith.constant dense<0.000000e+00> : vector<8x384xf32>
    %19 = tpu.matmul %18, %12, %cst_11 {dimension_numbers = #tpu.dot_dimension_numbers<[1], [0], [0], [1], [0, 0, 1, 1], [], []>} : vector<8x32xbf16>, vector<32x384xbf16>, vector<8x384xf32> -> vector<8x384xf32>
    %20 = vector.extract_strided_slice %17 {offsets = [0, 0], sizes = [8, 32], strides = [1, 1]} : vector<8x384xf32> to vector<8x32xf32>
    %21 = vector.extract_strided_slice %19 {offsets = [0, 0], sizes = [8, 32], strides = [1, 1]} : vector<8x384xf32> to vector<8x32xf32>
    %22 = arith.addf %20, %21 : vector<8x32xf32>
    %23 = arith.negf %22 : vector<8x32xf32>
    %24 = math.exp %23 : vector<8x32xf32>
    %cst_12 = arith.constant 1.000000e+00 : f32
    %25 = vector.broadcast %cst_12 : f32 to vector<8x32xf32>
    %26 = arith.addf %25, %24 : vector<8x32xf32>
    %27 = arith.divf %25, %26 : vector<8x32xf32>
    %28 = vector.extract_strided_slice %17 {offsets = [0, 128], sizes = [8, 32], strides = [1, 1]} : vector<8x384xf32> to vector<8x32xf32>
    %29 = vector.extract_strided_slice %19 {offsets = [0, 128], sizes = [8, 32], strides = [1, 1]} : vector<8x384xf32> to vector<8x32xf32>
    %30 = arith.addf %28, %29 : vector<8x32xf32>
    %31 = arith.negf %30 : vector<8x32xf32>
    %32 = math.exp %31 : vector<8x32xf32>
    %cst_13 = arith.constant 1.000000e+00 : f32
    %33 = vector.broadcast %cst_13 : f32 to vector<8x32xf32>
    %34 = arith.addf %33, %32 : vector<8x32xf32>
    %35 = arith.divf %33, %34 : vector<8x32xf32>
    %36 = vector.extract_strided_slice %17 {offsets = [0, 256], sizes = [8, 32], strides = [1, 1]} : vector<8x384xf32> to vector<8x32xf32>
    %37 = vector.extract_strided_slice %19 {offsets = [0, 256], sizes = [8, 32], strides = [1, 1]} : vector<8x384xf32> to vector<8x32xf32>
    %38 = arith.addf %37, %15 : vector<8x32xf32>
    %39 = arith.mulf %27, %38 : vector<8x32xf32>
    %40 = arith.addf %36, %39 : vector<8x32xf32>
    %41 = math.tanh %40 : vector<8x32xf32>
    %cst_14 = arith.constant 1.000000e+00 : f32
    %42 = vector.broadcast %cst_14 : f32 to vector<8x32xf32>
    %43 = arith.subf %42, %35 : vector<8x32xf32>
    %44 = arith.mulf %43, %41 : vector<8x32xf32>
    %45 = arith.mulf %35, %16 : vector<8x32xf32>
    %46 = arith.addf %44, %45 : vector<8x32xf32>
    %c0_15 = arith.constant 0 : index
    %c0_16 = arith.constant 0 : index
    %47 = vector.load %arg10[%c0_15, %c0_16] : memref<64x32xf32, #tpu.memory_space<vmem>>, vector<8x32xf32>
    tpu.vector_store %arg10[%c0_15, %c0_16], %46 {strides = array<i32>} : memref<64x32xf32, #tpu.memory_space<vmem>>, vector<8x32xf32>,
    %48 = vector.extract_strided_slice %11 {offsets = [8, 0], sizes = [8, 384], strides = [1, 1]} : vector<64x384xf32> to vector<8x384xf32>
    %49 = arith.truncf %46 : vector<8x32xf32> to vector<8x32xbf16>
    %cst_17 = arith.constant dense<0.000000e+00> : vector<8x384xf32>
    %50 = tpu.matmul %49, %12, %cst_17 {dimension_numbers = #tpu.dot_dimension_numbers<[1], [0], [0], [1], [0, 0, 1, 1], [], []>} : vector<8x32xbf16>, vector<32x384xbf16>, vector<8x384xf32> -> vector<8x384xf32>
    %51 = vector.extract_strided_slice %48 {offsets = [0, 0], sizes = [8, 32], strides = [1, 1]} : vector<8x384xf32> to vector<8x32xf32>
    %52 = vector.extract_strided_slice %50 {offsets = [0, 0], sizes = [8, 32], strides = [1, 1]} : vector<8x384xf32> to vector<8x32xf32>
    %53 = arith.addf %51, %52 : vector<8x32xf32>
    %54 = arith.negf %53 : vector<8x32xf32>
    %55 = math.exp %54 : vector<8x32xf32>
    %cst_18 = arith.constant 1.000000e+00 : f32
    %56 = vector.broadcast %cst_18 : f32 to vector<8x32xf32>
    %57 = arith.addf %56, %55 : vector<8x32xf32>
    %58 = arith.divf %56, %57 : vector<8x32xf32>
    %59 = vector.extract_strided_slice %48 {offsets = [0, 128], sizes = [8, 32], strides = [1, 1]} : vector<8x384xf32> to vector<8x32xf32>
    %60 = vector.extract_strided_slice %50 {offsets = [0, 128], sizes = [8, 32], strides = [1, 1]} : vector<8x384xf32> to vector<8x32xf32>
    %61 = arith.addf %59, %60 : vector<8x32xf32>
    %62 = arith.negf %61 : vector<8x32xf32>
    %63 = math.exp %62 : vector<8x32xf32>
    %cst_19 = arith.constant 1.000000e+00 : f32
    %64 = vector.broadcast %cst_19 : f32 to vector<8x32xf32>
    %65 = arith.addf %64, %63 : vector<8x32xf32>
    %66 = arith.divf %64, %65 : vector<8x32xf32>
    %67 = vector.extract_strided_slice %48 {offsets = [0, 256], sizes = [8, 32], strides = [1, 1]} : vector<8x384xf32> to vector<8x32xf32>
    %68 = vector.extract_strided_slice %50 {offsets = [0, 256], sizes = [8, 32], strides = [1, 1]} : vector<8x384xf32> to vector<8x32xf32>
    %69 = arith.addf %68, %15 : vector<8x32xf32>
    %70 = arith.mulf %58, %69 : vector<8x32xf32>
    %71 = arith.addf %67, %70 : vector<8x32xf32>
    %72 = math.tanh %71 : vector<8x32xf32>
    %cst_20 = arith.constant 1.000000e+00 : f32
    %73 = vector.broadcast %cst_20 : f32 to vector<8x32xf32>
    %74 = arith.subf %73, %66 : vector<8x32xf32>
    %75 = arith.mulf %74, %72 : vector<8x32xf32>
    %76 = arith.mulf %66, %46 : vector<8x32xf32>
    %77 = arith.addf %75, %76 : vector<8x32xf32>
    %c8 = arith.constant 8 : index
    %c0_21 = arith.constant 0 : index
    %78 = vector.load %arg10[%c8, %c0_21] : memref<64x32xf32, #tpu.memory_space<vmem>>, vector<8x32xf32>
    tpu.vector_store %arg10[%c8, %c0_21], %77 {strides = array<i32>} : memref<64x32xf32, #tpu.memory_space<vmem>>, vector<8x32xf32>,
    %79 = vector.extract_strided_slice %11 {offsets = [16, 0], sizes = [8, 384], strides = [1, 1]} : vector<64x384xf32> to vector<8x384xf32>
    %80 = arith.truncf %77 : vector<8x32xf32> to vector<8x32xbf16>
    %cst_22 = arith.constant dense<0.000000e+00> : vector<8x384xf32>
    %81 = tpu.matmul %80, %12, %cst_22 {dimension_numbers = #tpu.dot_dimension_numbers<[1], [0], [0], [1], [0, 0, 1, 1], [], []>} : vector<8x32xbf16>, vector<32x384xbf16>, vector<8x384xf32> -> vector<8x384xf32>
    %82 = vector.extract_strided_slice %79 {offsets = [0, 0], sizes = [8, 32], strides = [1, 1]} : vector<8x384xf32> to vector<8x32xf32>
    %83 = vector.extract_strided_slice %81 {offsets = [0, 0], sizes = [8, 32], strides = [1, 1]} : vector<8x384xf32> to vector<8x32xf32>
    %84 = arith.addf %82, %83 : vector<8x32xf32>
    %85 = arith.negf %84 : vector<8x32xf32>
    %86 = math.exp %85 : vector<8x32xf32>
    %cst_23 = arith.constant 1.000000e+00 : f32
    %87 = vector.broadcast %cst_23 : f32 to vector<8x32xf32>
    %88 = arith.addf %87, %86 : vector<8x32xf32>
    %89 = arith.divf %87, %88 : vector<8x32xf32>
    %90 = vector.extract_strided_slice %79 {offsets = [0, 128], sizes = [8, 32], strides = [1, 1]} : vector<8x384xf32> to vector<8x32xf32>
    %91 = vector.extract_strided_slice %81 {offsets = [0, 128], sizes = [8, 32], strides = [1, 1]} : vector<8x384xf32> to vector<8x32xf32>
    %92 = arith.addf %90, %91 : vector<8x32xf32>
    %93 = arith.negf %92 : vector<8x32xf32>
    %94 = math.exp %93 : vector<8x32xf32>
    %cst_24 = arith.constant 1.000000e+00 : f32
    %95 = vector.broadcast %cst_24 : f32 to vector<8x32xf32>
    %96 = arith.addf %95, %94 : vector<8x32xf32>
    %97 = arith.divf %95, %96 : vector<8x32xf32>
    %98 = vector.extract_strided_slice %79 {offsets = [0, 256], sizes = [8, 32], strides = [1, 1]} : vector<8x384xf32> to vector<8x32xf32>
    %99 = vector.extract_strided_slice %81 {offsets = [0, 256], sizes = [8, 32], strides = [1, 1]} : vector<8x384xf32> to vector<8x32xf32>
    %100 = arith.addf %99, %15 : vector<8x32xf32>
    %101 = arith.mulf %89, %100 : vector<8x32xf32>
    %102 = arith.addf %98, %101 : vector<8x32xf32>
    %103 = math.tanh %102 : vector<8x32xf32>
    %cst_25 = arith.constant 1.000000e+00 : f32
    %104 = vector.broadcast %cst_25 : f32 to vector<8x32xf32>
    %105 = arith.subf %104, %97 : vector<8x32xf32>
    %106 = arith.mulf %105, %103 : vector<8x32xf32>
    %107 = arith.mulf %97, %77 : vector<8x32xf32>
    %108 = arith.addf %106, %107 : vector<8x32xf32>
    %c16 = arith.constant 16 : index
    %c0_26 = arith.constant 0 : index
    %109 = vector.load %arg10[%c16, %c0_26] : memref<64x32xf32, #tpu.memory_space<vmem>>, vector<8x32xf32>
    tpu.vector_store %arg10[%c16, %c0_26], %108 {strides = array<i32>} : memref<64x32xf32, #tpu.memory_space<vmem>>, vector<8x32xf32>,
    %110 = vector.extract_strided_slice %11 {offsets = [24, 0], sizes = [8, 384], strides = [1, 1]} : vector<64x384xf32> to vector<8x384xf32>
    %111 = arith.truncf %108 : vector<8x32xf32> to vector<8x32xbf16>
    %cst_27 = arith.constant dense<0.000000e+00> : vector<8x384xf32>
    %112 = tpu.matmul %111, %12, %cst_27 {dimension_numbers = #tpu.dot_dimension_numbers<[1], [0], [0], [1], [0, 0, 1, 1], [], []>} : vector<8x32xbf16>, vector<32x384xbf16>, vector<8x384xf32> -> vector<8x384xf32>
    %113 = vector.extract_strided_slice %110 {offsets = [0, 0], sizes = [8, 32], strides = [1, 1]} : vector<8x384xf32> to vector<8x32xf32>
    %114 = vector.extract_strided_slice %112 {offsets = [0, 0], sizes = [8, 32], strides = [1, 1]} : vector<8x384xf32> to vector<8x32xf32>
    %115 = arith.addf %113, %114 : vector<8x32xf32>
    %116 = arith.negf %115 : vector<8x32xf32>
    %117 = math.exp %116 : vector<8x32xf32>
    %cst_28 = arith.constant 1.000000e+00 : f32
    %118 = vector.broadcast %cst_28 : f32 to vector<8x32xf32>
    %119 = arith.addf %118, %117 : vector<8x32xf32>
    %120 = arith.divf %118, %119 : vector<8x32xf32>
    %121 = vector.extract_strided_slice %110 {offsets = [0, 128], sizes = [8, 32], strides = [1, 1]} : vector<8x384xf32> to vector<8x32xf32>
    %122 = vector.extract_strided_slice %112 {offsets = [0, 128], sizes = [8, 32], strides = [1, 1]} : vector<8x384xf32> to vector<8x32xf32>
    %123 = arith.addf %121, %122 : vector<8x32xf32>
    %124 = arith.negf %123 : vector<8x32xf32>
    %125 = math.exp %124 : vector<8x32xf32>
    %cst_29 = arith.constant 1.000000e+00 : f32
    %126 = vector.broadcast %cst_29 : f32 to vector<8x32xf32>
    %127 = arith.addf %126, %125 : vector<8x32xf32>
    %128 = arith.divf %126, %127 : vector<8x32xf32>
    %129 = vector.extract_strided_slice %110 {offsets = [0, 256], sizes = [8, 32], strides = [1, 1]} : vector<8x384xf32> to vector<8x32xf32>
    %130 = vector.extract_strided_slice %112 {offsets = [0, 256], sizes = [8, 32], strides = [1, 1]} : vector<8x384xf32> to vector<8x32xf32>
    %131 = arith.addf %130, %15 : vector<8x32xf32>
    %132 = arith.mulf %120, %131 : vector<8x32xf32>
    %133 = arith.addf %129, %132 : vector<8x32xf32>
    %134 = math.tanh %133 : vector<8x32xf32>
    %cst_30 = arith.constant 1.000000e+00 : f32
    %135 = vector.broadcast %cst_30 : f32 to vector<8x32xf32>
    %136 = arith.subf %135, %128 : vector<8x32xf32>
    %137 = arith.mulf %136, %134 : vector<8x32xf32>
    %138 = arith.mulf %128, %108 : vector<8x32xf32>
    %139 = arith.addf %137, %138 : vector<8x32xf32>
    %c24 = arith.constant 24 : index
    %c0_31 = arith.constant 0 : index
    %140 = vector.load %arg10[%c24, %c0_31] : memref<64x32xf32, #tpu.memory_space<vmem>>, vector<8x32xf32>
    tpu.vector_store %arg10[%c24, %c0_31], %139 {strides = array<i32>} : memref<64x32xf32, #tpu.memory_space<vmem>>, vector<8x32xf32>,
    %141 = vector.extract_strided_slice %11 {offsets = [32, 0], sizes = [8, 384], strides = [1, 1]} : vector<64x384xf32> to vector<8x384xf32>
    %142 = arith.truncf %139 : vector<8x32xf32> to vector<8x32xbf16>
    %cst_32 = arith.constant dense<0.000000e+00> : vector<8x384xf32>
    %143 = tpu.matmul %142, %12, %cst_32 {dimension_numbers = #tpu.dot_dimension_numbers<[1], [0], [0], [1], [0, 0, 1, 1], [], []>} : vector<8x32xbf16>, vector<32x384xbf16>, vector<8x384xf32> -> vector<8x384xf32>
    %144 = vector.extract_strided_slice %141 {offsets = [0, 0], sizes = [8, 32], strides = [1, 1]} : vector<8x384xf32> to vector<8x32xf32>
    %145 = vector.extract_strided_slice %143 {offsets = [0, 0], sizes = [8, 32], strides = [1, 1]} : vector<8x384xf32> to vector<8x32xf32>
    %146 = arith.addf %144, %145 : vector<8x32xf32>
    %147 = arith.negf %146 : vector<8x32xf32>
    %148 = math.exp %147 : vector<8x32xf32>
    %cst_33 = arith.constant 1.000000e+00 : f32
    %149 = vector.broadcast %cst_33 : f32 to vector<8x32xf32>
    %150 = arith.addf %149, %148 : vector<8x32xf32>
    %151 = arith.divf %149, %150 : vector<8x32xf32>
    %152 = vector.extract_strided_slice %141 {offsets = [0, 128], sizes = [8, 32], strides = [1, 1]} : vector<8x384xf32> to vector<8x32xf32>
    %153 = vector.extract_strided_slice %143 {offsets = [0, 128], sizes = [8, 32], strides = [1, 1]} : vector<8x384xf32> to vector<8x32xf32>
    %154 = arith.addf %152, %153 : vector<8x32xf32>
    %155 = arith.negf %154 : vector<8x32xf32>
    %156 = math.exp %155 : vector<8x32xf32>
    %cst_34 = arith.constant 1.000000e+00 : f32
    %157 = vector.broadcast %cst_34 : f32 to vector<8x32xf32>
    %158 = arith.addf %157, %156 : vector<8x32xf32>
    %159 = arith.divf %157, %158 : vector<8x32xf32>
    %160 = vector.extract_strided_slice %141 {offsets = [0, 256], sizes = [8, 32], strides = [1, 1]} : vector<8x384xf32> to vector<8x32xf32>
    %161 = vector.extract_strided_slice %143 {offsets = [0, 256], sizes = [8, 32], strides = [1, 1]} : vector<8x384xf32> to vector<8x32xf32>
    %162 = arith.addf %161, %15 : vector<8x32xf32>
    %163 = arith.mulf %151, %162 : vector<8x32xf32>
    %164 = arith.addf %160, %163 : vector<8x32xf32>
    %165 = math.tanh %164 : vector<8x32xf32>
    %cst_35 = arith.constant 1.000000e+00 : f32
    %166 = vector.broadcast %cst_35 : f32 to vector<8x32xf32>
    %167 = arith.subf %166, %159 : vector<8x32xf32>
    %168 = arith.mulf %167, %165 : vector<8x32xf32>
    %169 = arith.mulf %159, %139 : vector<8x32xf32>
    %170 = arith.addf %168, %169 : vector<8x32xf32>
    %c32 = arith.constant 32 : index
    %c0_36 = arith.constant 0 : index
    %171 = vector.load %arg10[%c32, %c0_36] : memref<64x32xf32, #tpu.memory_space<vmem>>, vector<8x32xf32>
    tpu.vector_store %arg10[%c32, %c0_36], %170 {strides = array<i32>} : memref<64x32xf32, #tpu.memory_space<vmem>>, vector<8x32xf32>,
    %172 = vector.extract_strided_slice %11 {offsets = [40, 0], sizes = [8, 384], strides = [1, 1]} : vector<64x384xf32> to vector<8x384xf32>
    %173 = arith.truncf %170 : vector<8x32xf32> to vector<8x32xbf16>
    %cst_37 = arith.constant dense<0.000000e+00> : vector<8x384xf32>
    %174 = tpu.matmul %173, %12, %cst_37 {dimension_numbers = #tpu.dot_dimension_numbers<[1], [0], [0], [1], [0, 0, 1, 1], [], []>} : vector<8x32xbf16>, vector<32x384xbf16>, vector<8x384xf32> -> vector<8x384xf32>
    %175 = vector.extract_strided_slice %172 {offsets = [0, 0], sizes = [8, 32], strides = [1, 1]} : vector<8x384xf32> to vector<8x32xf32>
    %176 = vector.extract_strided_slice %174 {offsets = [0, 0], sizes = [8, 32], strides = [1, 1]} : vector<8x384xf32> to vector<8x32xf32>
    %177 = arith.addf %175, %176 : vector<8x32xf32>
    %178 = arith.negf %177 : vector<8x32xf32>
    %179 = math.exp %178 : vector<8x32xf32>
    %cst_38 = arith.constant 1.000000e+00 : f32
    %180 = vector.broadcast %cst_38 : f32 to vector<8x32xf32>
    %181 = arith.addf %180, %179 : vector<8x32xf32>
    %182 = arith.divf %180, %181 : vector<8x32xf32>
    %183 = vector.extract_strided_slice %172 {offsets = [0, 128], sizes = [8, 32], strides = [1, 1]} : vector<8x384xf32> to vector<8x32xf32>
    %184 = vector.extract_strided_slice %174 {offsets = [0, 128], sizes = [8, 32], strides = [1, 1]} : vector<8x384xf32> to vector<8x32xf32>
    %185 = arith.addf %183, %184 : vector<8x32xf32>
    %186 = arith.negf %185 : vector<8x32xf32>
    %187 = math.exp %186 : vector<8x32xf32>
    %cst_39 = arith.constant 1.000000e+00 : f32
    %188 = vector.broadcast %cst_39 : f32 to vector<8x32xf32>
    %189 = arith.addf %188, %187 : vector<8x32xf32>
    %190 = arith.divf %188, %189 : vector<8x32xf32>
    %191 = vector.extract_strided_slice %172 {offsets = [0, 256], sizes = [8, 32], strides = [1, 1]} : vector<8x384xf32> to vector<8x32xf32>
    %192 = vector.extract_strided_slice %174 {offsets = [0, 256], sizes = [8, 32], strides = [1, 1]} : vector<8x384xf32> to vector<8x32xf32>
    %193 = arith.addf %192, %15 : vector<8x32xf32>
    %194 = arith.mulf %182, %193 : vector<8x32xf32>
    %195 = arith.addf %191, %194 : vector<8x32xf32>
    %196 = math.tanh %195 : vector<8x32xf32>
    %cst_40 = arith.constant 1.000000e+00 : f32
    %197 = vector.broadcast %cst_40 : f32 to vector<8x32xf32>
    %198 = arith.subf %197, %190 : vector<8x32xf32>
    %199 = arith.mulf %198, %196 : vector<8x32xf32>
    %200 = arith.mulf %190, %170 : vector<8x32xf32>
    %201 = arith.addf %199, %200 : vector<8x32xf32>
    %c40 = arith.constant 40 : index
    %c0_41 = arith.constant 0 : index
    %202 = vector.load %arg10[%c40, %c0_41] : memref<64x32xf32, #tpu.memory_space<vmem>>, vector<8x32xf32>
    tpu.vector_store %arg10[%c40, %c0_41], %201 {strides = array<i32>} : memref<64x32xf32, #tpu.memory_space<vmem>>, vector<8x32xf32>,
    %203 = vector.extract_strided_slice %11 {offsets = [48, 0], sizes = [8, 384], strides = [1, 1]} : vector<64x384xf32> to vector<8x384xf32>
    %204 = arith.truncf %201 : vector<8x32xf32> to vector<8x32xbf16>
    %cst_42 = arith.constant dense<0.000000e+00> : vector<8x384xf32>
    %205 = tpu.matmul %204, %12, %cst_42 {dimension_numbers = #tpu.dot_dimension_numbers<[1], [0], [0], [1], [0, 0, 1, 1], [], []>} : vector<8x32xbf16>, vector<32x384xbf16>, vector<8x384xf32> -> vector<8x384xf32>
    %206 = vector.extract_strided_slice %203 {offsets = [0, 0], sizes = [8, 32], strides = [1, 1]} : vector<8x384xf32> to vector<8x32xf32>
    %207 = vector.extract_strided_slice %205 {offsets = [0, 0], sizes = [8, 32], strides = [1, 1]} : vector<8x384xf32> to vector<8x32xf32>
    %208 = arith.addf %206, %207 : vector<8x32xf32>
    %209 = arith.negf %208 : vector<8x32xf32>
    %210 = math.exp %209 : vector<8x32xf32>
    %cst_43 = arith.constant 1.000000e+00 : f32
    %211 = vector.broadcast %cst_43 : f32 to vector<8x32xf32>
    %212 = arith.addf %211, %210 : vector<8x32xf32>
    %213 = arith.divf %211, %212 : vector<8x32xf32>
    %214 = vector.extract_strided_slice %203 {offsets = [0, 128], sizes = [8, 32], strides = [1, 1]} : vector<8x384xf32> to vector<8x32xf32>
    %215 = vector.extract_strided_slice %205 {offsets = [0, 128], sizes = [8, 32], strides = [1, 1]} : vector<8x384xf32> to vector<8x32xf32>
    %216 = arith.addf %214, %215 : vector<8x32xf32>
    %217 = arith.negf %216 : vector<8x32xf32>
    %218 = math.exp %217 : vector<8x32xf32>
    %cst_44 = arith.constant 1.000000e+00 : f32
    %219 = vector.broadcast %cst_44 : f32 to vector<8x32xf32>
    %220 = arith.addf %219, %218 : vector<8x32xf32>
    %221 = arith.divf %219, %220 : vector<8x32xf32>
    %222 = vector.extract_strided_slice %203 {offsets = [0, 256], sizes = [8, 32], strides = [1, 1]} : vector<8x384xf32> to vector<8x32xf32>
    %223 = vector.extract_strided_slice %205 {offsets = [0, 256], sizes = [8, 32], strides = [1, 1]} : vector<8x384xf32> to vector<8x32xf32>
    %224 = arith.addf %223, %15 : vector<8x32xf32>
    %225 = arith.mulf %213, %224 : vector<8x32xf32>
    %226 = arith.addf %222, %225 : vector<8x32xf32>
    %227 = math.tanh %226 : vector<8x32xf32>
    %cst_45 = arith.constant 1.000000e+00 : f32
    %228 = vector.broadcast %cst_45 : f32 to vector<8x32xf32>
    %229 = arith.subf %228, %221 : vector<8x32xf32>
    %230 = arith.mulf %229, %227 : vector<8x32xf32>
    %231 = arith.mulf %221, %201 : vector<8x32xf32>
    %232 = arith.addf %230, %231 : vector<8x32xf32>
    %c48 = arith.constant 48 : index
    %c0_46 = arith.constant 0 : index
    %233 = vector.load %arg10[%c48, %c0_46] : memref<64x32xf32, #tpu.memory_space<vmem>>, vector<8x32xf32>
    tpu.vector_store %arg10[%c48, %c0_46], %232 {strides = array<i32>} : memref<64x32xf32, #tpu.memory_space<vmem>>, vector<8x32xf32>,
    %234 = vector.extract_strided_slice %11 {offsets = [56, 0], sizes = [8, 384], strides = [1, 1]} : vector<64x384xf32> to vector<8x384xf32>
    %235 = arith.truncf %232 : vector<8x32xf32> to vector<8x32xbf16>
    %cst_47 = arith.constant dense<0.000000e+00> : vector<8x384xf32>
    %236 = tpu.matmul %235, %12, %cst_47 {dimension_numbers = #tpu.dot_dimension_numbers<[1], [0], [0], [1], [0, 0, 1, 1], [], []>} : vector<8x32xbf16>, vector<32x384xbf16>, vector<8x384xf32> -> vector<8x384xf32>
    %237 = vector.extract_strided_slice %234 {offsets = [0, 0], sizes = [8, 32], strides = [1, 1]} : vector<8x384xf32> to vector<8x32xf32>
    %238 = vector.extract_strided_slice %236 {offsets = [0, 0], sizes = [8, 32], strides = [1, 1]} : vector<8x384xf32> to vector<8x32xf32>
    %239 = arith.addf %237, %238 : vector<8x32xf32>
    %240 = arith.negf %239 : vector<8x32xf32>
    %241 = math.exp %240 : vector<8x32xf32>
    %cst_48 = arith.constant 1.000000e+00 : f32
    %242 = vector.broadcast %cst_48 : f32 to vector<8x32xf32>
    %243 = arith.addf %242, %241 : vector<8x32xf32>
    %244 = arith.divf %242, %243 : vector<8x32xf32>
    %245 = vector.extract_strided_slice %234 {offsets = [0, 128], sizes = [8, 32], strides = [1, 1]} : vector<8x384xf32> to vector<8x32xf32>
    %246 = vector.extract_strided_slice %236 {offsets = [0, 128], sizes = [8, 32], strides = [1, 1]} : vector<8x384xf32> to vector<8x32xf32>
    %247 = arith.addf %245, %246 : vector<8x32xf32>
    %248 = arith.negf %247 : vector<8x32xf32>
    %249 = math.exp %248 : vector<8x32xf32>
    %cst_49 = arith.constant 1.000000e+00 : f32
    %250 = vector.broadcast %cst_49 : f32 to vector<8x32xf32>
    %251 = arith.addf %250, %249 : vector<8x32xf32>
    %252 = arith.divf %250, %251 : vector<8x32xf32>
    %253 = vector.extract_strided_slice %234 {offsets = [0, 256], sizes = [8, 32], strides = [1, 1]} : vector<8x384xf32> to vector<8x32xf32>
    %254 = vector.extract_strided_slice %236 {offsets = [0, 256], sizes = [8, 32], strides = [1, 1]} : vector<8x384xf32> to vector<8x32xf32>
    %255 = arith.addf %254, %15 : vector<8x32xf32>
    %256 = arith.mulf %244, %255 : vector<8x32xf32>
    %257 = arith.addf %253, %256 : vector<8x32xf32>
    %258 = math.tanh %257 : vector<8x32xf32>
    %cst_50 = arith.constant 1.000000e+00 : f32
    %259 = vector.broadcast %cst_50 : f32 to vector<8x32xf32>
    %260 = arith.subf %259, %252 : vector<8x32xf32>
    %261 = arith.mulf %260, %258 : vector<8x32xf32>
    %262 = arith.mulf %252, %232 : vector<8x32xf32>
    %263 = arith.addf %261, %262 : vector<8x32xf32>
    %c56 = arith.constant 56 : index
    %c0_51 = arith.constant 0 : index
    %264 = vector.load %arg10[%c56, %c0_51] : memref<64x32xf32, #tpu.memory_space<vmem>>, vector<8x32xf32>
    tpu.vector_store %arg10[%c56, %c0_51], %263 {strides = array<i32>} : memref<64x32xf32, #tpu.memory_space<vmem>>, vector<8x32xf32>,
    %c0_52 = arith.constant 0 : index
    %c0_53 = arith.constant 0 : index
    %265 = vector.load %arg9[%c0_52, %c0_53] : memref<8x32xf32, #tpu.memory_space<vmem>>, vector<8x32xf32>
    tpu.vector_store %arg9[%c0_52, %c0_53], %263 {strides = array<i32>} : memref<8x32xf32, #tpu.memory_space<vmem>>, vector<8x32xf32>,
    %c0_54 = arith.constant 0 : index
    %c0_55 = arith.constant 0 : index
    %266 = vector.load %arg10[%c0_54, %c0_55] : memref<64x32xf32, #tpu.memory_space<vmem>>, vector<64x32xf32>
    %267 = arith.truncf %266 : vector<64x32xf32> to vector<64x32xbf16>
    %c0_56 = arith.constant 0 : index
    %c0_57 = arith.constant 0 : index
    %268 = vector.load %arg6[%c0_56, %c0_57] : memref<32x32xbf16, #tpu.memory_space<vmem>>, vector<32x32xbf16>
    %cst_58 = arith.constant dense<0.000000e+00> : vector<64x32xf32>
    %269 = tpu.matmul %267, %268, %cst_58 {dimension_numbers = #tpu.dot_dimension_numbers<[1], [0], [0], [1], [0, 0, 1, 1], [], []>} : vector<64x32xbf16>, vector<32x32xbf16>, vector<64x32xf32> -> vector<64x32xf32>
    %c0_59 = arith.constant 0 : index
    %c0_60 = arith.constant 0 : index
    %270 = vector.load %arg7[%c0_59, %c0_60] : memref<1x32xf32, #tpu.memory_space<vmem>>, vector<1x32xf32>
    %271 = vector.broadcast %270 : vector<1x32xf32> to vector<64x32xf32>
    %272 = arith.addf %269, %271 : vector<64x32xf32>
    %c0_61 = arith.constant 0 : index
    %c0_62 = arith.constant 0 : index
    %273 = vector.load %arg8[%c0_61, %c0_62] : memref<64x32xf32, #tpu.memory_space<vmem>>, vector<64x32xf32>
    tpu.vector_store %arg8[%c0_61, %c0_62], %272 {strides = array<i32>} : memref<64x32xf32, #tpu.memory_space<vmem>>, vector<64x32xf32>,
    return
  }
}

</mosaic_0001>

<llo_original>
// kernel: decoder_forward.1
$region0: #{decoder_forward.1}
  #allocation0 [shape = 'u32[]', space=smem, size = 0x4, offset = 0x4, fixed_abs, tag = 'smem constant byte address 0x4 - core index']
  #allocation1 [shape = 'u32[144,128]{1,0:T(1,128)}', space=vmem, size = 0x12000, scoped, tag = 'internal scratch']
  #allocation2 [shape = 'f32[64,32]{1,0:T(8,128)}', space=vmem, size = 0x8000, scoped, tag = 'scratch operand']
  %s0 = inlined_call_operand.vmem [shape: s32[64,1], index: 0, kind: input, shape index: {}]
  %s1 = inlined_call_operand.vmem [shape: f32[8,32], index: 1, kind: input, shape index: {}]
  %s2 = inlined_call_operand.vmem [shape: bf16[32,384], index: 2, kind: input, shape index: {}]
  %s3 = inlined_call_operand.vmem [shape: bf16[32,384], index: 3, kind: input, shape index: {}]
  %s4 = inlined_call_operand.vmem [shape: f32[1,384], index: 4, kind: input, shape index: {}]
  %s5 = inlined_call_operand.vmem [shape: f32[1,32], index: 5, kind: input, shape index: {}]
  %s6 = inlined_call_operand.vmem [shape: bf16[32,32], index: 6, kind: input, shape index: {}]
  %s7 = inlined_call_operand.vmem [shape: f32[1,32], index: 7, kind: input, shape index: {}]
  %s8 = inlined_call_operand.vmem [shape: f32[64,32], index: 8, kind: output, shape index: {0}]
  %s9 = inlined_call_operand.vmem [shape: f32[8,32], index: 9, kind: output, shape index: {1}]
  %10 = xla_tuple %s8, %s9
  %s11 = sld [smem:[#allocation0]]
  $region50: #{decoder_forward.1} parent=0
    _
  %s13 = ssub.s32 1, %s11
  %s14 = scalar_select 0, %s13, %s11
  // Predicated region
  $region2: #{decoder_forward.1} parent=0 // pred_check
    _
  $region3: #{decoder_forward.1} parent=0 // pred_check_branch
    %16 = sbr.rel (0) target = $region5
  $region4: #{decoder_forward.1} parent=0 // pred_region
    _
  $region5: #{decoder_forward.1} parent=0 // pred_fallthru
    _
  // Predicated region
  $region6: #{decoder_forward.1} parent=0 // pred_check
    _
  $region7: #{decoder_forward.1} parent=0 // pred_check_branch
    %18 = sbr.rel (0) target = $region9
  $region8: #{decoder_forward.1} parent=0 // pred_region
    _
  $region9: #{decoder_forward.1} parent=0 // pred_fallthru
    _
  // Predicated region
  $region10: #{decoder_forward.1} parent=0 // pred_check
    _
  $region11: #{decoder_forward.1} parent=0 // pred_check_branch
    %20 = sbr.rel (0) target = $region13
  $region12: #{decoder_forward.1} parent=0 // pred_region
    _
  $region13: #{decoder_forward.1} parent=0 // pred_fallthru
    _
  // Predicated region
  $region14: #{decoder_forward.1} parent=0 // pred_check
    _
  $region15: #{decoder_forward.1} parent=0 // pred_check_branch
    %22 = sbr.rel (0) target = $region17
  $region16: #{decoder_forward.1} parent=0 // pred_region
    _
  $region17: #{decoder_forward.1} parent=0 // pred_fallthru
    _
  // Predicated region
  $region18: #{decoder_forward.1} parent=0 // pred_check
    _
  $region19: #{decoder_forward.1} parent=0 // pred_check_branch
    %24 = sbr.rel (0) target = $region21
  $region20: #{decoder_forward.1} parent=0 // pred_region
    _
  $region21: #{decoder_forward.1} parent=0 // pred_fallthru
    _
  // Predicated region
  $region22: #{decoder_forward.1} parent=0 // pred_check
    _
  $region23: #{decoder_forward.1} parent=0 // pred_check_branch
    %26 = sbr.rel (0) target = $region25
  $region24: #{decoder_forward.1} parent=0 // pred_region
    _
  $region25: #{decoder_forward.1} parent=0 // pred_fallthru
    _
  // Predicated region
  $region26: #{decoder_forward.1} parent=0 // pred_check
    _
  $region27: #{decoder_forward.1} parent=0 // pred_check_branch
    %28 = sbr.rel (0) target = $region29
  $region28: #{decoder_forward.1} parent=0 // pred_region
    _
  $region29: #{decoder_forward.1} parent=0 // pred_fallthru
    _
  // Predicated region
  $region30: #{decoder_forward.1} parent=0 // pred_check
    _
  $region31: #{decoder_forward.1} parent=0 // pred_check_branch
    %30 = sbr.rel (0) target = $region33
  $region32: #{decoder_forward.1} parent=0 // pred_region
    _
  $region33: #{decoder_forward.1} parent=0 // pred_fallthru
    _
  %v32 = vld [vmem:[%s0] sm:$0xff]
  %v33 = vld [vmem:[%s0 + $0x8] sm:$0xff]
  %v34 = vld [vmem:[%s0 + $0x10] sm:$0xff]
  %v35 = vld [vmem:[%s0 + $0x18] sm:$0xff]
  %v36 = vld [vmem:[%s0 + $0x20] sm:$0xff]
  %v37 = vld [vmem:[%s0 + $0x28] sm:$0xff]
  %v38 = vld [vmem:[%s0 + $0x30] sm:$0xff]
  %v39 = vld [vmem:[%s0 + $0x38] sm:$0xff]
  %v40 = vlaneseq
  %v41 = vand.u32 %v40, 127
  %42 = vset.pattern.permute.xlu0 0
  %43 = vperm.xlu0 %42, %v32
  %v44 = vpop.permute.xlu0 %43
  %45 = vset.pattern.permute.xlu0 0
  %46 = vperm.xlu0 %45, %v33
  %v47 = vpop.permute.xlu0 %46
  %48 = vset.pattern.permute.xlu0 0
  %49 = vperm.xlu0 %48, %v34
  %v50 = vpop.permute.xlu0 %49
  %51 = vset.pattern.permute.xlu0 0
  %52 = vperm.xlu0 %51, %v35
  %v53 = vpop.permute.xlu0 %52
  %54 = vset.pattern.permute.xlu0 0
  %55 = vperm.xlu0 %54, %v36
  %v56 = vpop.permute.xlu0 %55
  %57 = vset.pattern.permute.xlu0 0
  %58 = vperm.xlu0 %57, %v37
  %v59 = vpop.permute.xlu0 %58
  %60 = vset.pattern.permute.xlu0 0
  %61 = vperm.xlu0 %60, %v38
  %v62 = vpop.permute.xlu0 %61
  %63 = vset.pattern.permute.xlu0 0
  %64 = vperm.xlu0 %63, %v39
  %v65 = vpop.permute.xlu0 %64
  %vm66 = vcmp.eq.s32.totalorder %v44, %v41
  %vm67 = vcmp.eq.s32.totalorder %v47, %v41
  %vm68 = vcmp.eq.s32.totalorder %v50, %v41
  %vm69 = vcmp.eq.s32.totalorder %v53, %v41
  %vm70 = vcmp.eq.s32.totalorder %v56, %v41
  %vm71 = vcmp.eq.s32.totalorder %v59, %v41
  %vm72 = vcmp.eq.s32.totalorder %v62, %v41
  %vm73 = vcmp.eq.s32.totalorder %v65, %v41
  %v74 = vsel %vm66, 1, 0
  %v75 = vsel %vm67, 1, 0
  %v76 = vsel %vm68, 1, 0
  %v77 = vsel %vm69, 1, 0
  %v78 = vsel %vm70, 1, 0
  %v79 = vsel %vm71, 1, 0
  %v80 = vsel %vm72, 1, 0
  %v81 = vsel %vm73, 1, 0
  %v82 = vcvt.s32.f32 %v74
  %v83 = vcvt.s32.f32 %v75
  %v84 = vcvt.s32.f32 %v76
  %v85 = vcvt.s32.f32 %v77
  %v86 = vcvt.s32.f32 %v78
  %v87 = vcvt.s32.f32 %v79
  %v88 = vcvt.s32.f32 %v80
  %v89 = vcvt.s32.f32 %v81
  %v90 = vpack.c.bf16 %v83, %v82
  %v91 = vpack.c.bf16 %v85, %v84
  %v92 = vpack.c.bf16 %v87, %v86
  %v93 = vpack.c.bf16 %v89, %v88
  %v94 = vld [vmem:[%s2] sm:$0xff]
  %v95 = vld [vmem:[%s2 + $0x8] sm:$0xf]
  %v96 = vld [vmem:[%s2 + $0xc] sm:$0xff]
  %v97 = vld [vmem:[%s2 + $0x14] sm:$0xf]
  %v98 = vld [vmem:[%s2 + $0x18] sm:$0xff]
  %v99 = vld [vmem:[%s2 + $0x20] sm:$0xf]
  %v100 = vld [vmem:[%s2 + $0x24] sm:$0xff]
  %v101 = vld [vmem:[%s2 + $0x2c] sm:$0xf]
  %v102 = vld [vmem:[%s4] sm:$0x7]
  %v104 = vlaneseq
  %v105 = vshrl.u32 %v104, 7
  %v106 = vsub.s32 0, %v105
  %v107 = vrot.slane %v102, %v106
  %v108 = vlaneseq
  %v109 = vshrl.u32 %v108, 7
  %v110 = vsub.s32 1, %v109
  %v111 = vrot.slane %v102, %v110
  %v112 = vlaneseq
  %v113 = vshrl.u32 %v112, 7
  %v114 = vsub.s32 2, %v113
  %v115 = vrot.slane %v102, %v114
  %v127 = vunpack.c.l.b16 %v94
  %v128 = vunpack.c.h.b16 %v94
  %v129 = vunpack.c.l.b16 %v95
  %v130 = vunpack.c.l.b16 %v96
  %v131 = vunpack.c.h.b16 %v96
  %v132 = vunpack.c.l.b16 %v97
  %v133 = vunpack.c.l.b16 %v98
  %v134 = vunpack.c.h.b16 %v98
  %v135 = vunpack.c.l.b16 %v99
  %v136 = vunpack.c.l.b16 %v100
  %v137 = vunpack.c.h.b16 %v100
  %v138 = vunpack.c.l.b16 %v101
  %v139 = vpack.c.b16 %v130, %v127
  %v140 = vpack.c.b16 %v131, %v128
  %v141 = vpack.c.b16 %v132, %v129
  %v142 = vpack.c.b16 %v136, %v133
  %v143 = vpack.c.b16 %v137, %v134
  %v144 = vpack.c.b16 %v138, %v135
  %vm151 = vcmask 261120
  %v153 = vsel %vm151, %v90, 0
  %v156 = vsel %vm151, %v91, 0
  %v159 = vsel %vm151, %v92, 0
  %v162 = vsel %vm151, %v93, 0
  %164 = vmatprep.subr.bf16.mxu0 %v140
  %165 = vmatpush1.bf16.msra.mxu0 %v139
  %166 = vmatprep.subr.bf16.mxu0 %v143
  %167 = vmatpush1.bf16.msra.mxu0 %v142
  %168 = vmatprep.subr.bf16.mxu0 0
  %169 = vmatpush1.bf16.msra.mxu0 0
  %170 = vmatprep.subr.bf16.mxu0 0
  %171 = vmatpush1.bf16.msra.mxu0 0
  %172 = vmatprep.subr.bf16.mxu0 0
  %173 = vmatpush1.bf16.msra.mxu0 0
  %174 = vmatprep.subr.bf16.mxu0 0
  %175 = vmatpush1.bf16.msra.mxu0 0
  %176 = vmatprep.subr.bf16.mxu0 0
  %177 = vmatpush1.bf16.msra.mxu0 0
  %178 = vmatprep.subr.bf16.mxu0 0
  %179 = vmatpush1.bf16.msra.mxu0 0
  %180 = vmatprep.subr.bf16.mxu0 0
  %181 = vmatpush1.bf16.msra.mxu0 0
  %182 = vmatprep.subr.bf16.mxu0 0
  %183 = vmatpush1.bf16.msra.mxu0 0
  %184 = vmatprep.subr.bf16.mxu0 0
  %185 = vmatpush1.bf16.msra.mxu0 0
  %186 = vmatprep.subr.bf16.mxu0 0
  %187 = vmatpush1.bf16.msra.mxu0 0
  %188 = vmatprep.subr.bf16.mxu0 0
  %189 = vmatpush1.bf16.msra.mxu0 0
  %190 = vmatprep.subr.bf16.mxu0 0
  %191 = vmatpush1.bf16.msra.mxu0 0
  %192 = vmatprep.subr.bf16.mxu0 0
  %193 = vmatpush1.bf16.msra.mxu0 0
  %194 = vmatprep.subr.bf16.mxu0 0
  %195 = vmatpush1.bf16.msra.mxu0 0
  %196 = vmatprep.mubr.bf16.mxu0 0
  %197 = vmatmul.mubr.bf16.gmra.mrb[0].mxu0 %v153
  %v198 = vpop.f32.mrb[0].mxu0
  %v199 = vadd.f32 %v107, %v198
  %v200 = vpop.f32.mrb[0].mxu0
  %v201 = vadd.f32 %v111, %v200
  %v202 = vpop.f32.mrb[0].mxu0
  %v203 = vadd.f32 %v107, %v202
  %v204 = vpop.f32.mrb[0].mxu0
  %v205 = vadd.f32 %v111, %v204
  %206 = vmatprep.mubr.bf16.mxu0 0
  %207 = vmatmul.mubr.bf16.gmra.mrb[0].mxu0 %v156
  %v208 = vpop.f32.mrb[0].mxu0
  %v209 = vadd.f32 %v107, %v208
  %v210 = vpop.f32.mrb[0].mxu0
  %v211 = vadd.f32 %v111, %v210
  %v212 = vpop.f32.mrb[0].mxu0
  %v213 = vadd.f32 %v107, %v212
  %v214 = vpop.f32.mrb[0].mxu0
  %v215 = vadd.f32 %v111, %v214
  %216 = vmatprep.mubr.bf16.mxu0 0
  %217 = vmatmul.mubr.bf16.gmra.mrb[0].mxu0 %v159
  %v218 = vpop.f32.mrb[0].mxu0
  %v219 = vadd.f32 %v107, %v218
  %v220 = vpop.f32.mrb[0].mxu0
  %v221 = vadd.f32 %v111, %v220
  %v222 = vpop.f32.mrb[0].mxu0
  %v223 = vadd.f32 %v107, %v222
  %v224 = vpop.f32.mrb[0].mxu0
  %v225 = vadd.f32 %v111, %v224
  %226 = vmatprep.mubr.bf16.mxu0 0
  %227 = vmatmul.mubr.bf16.gmra.mrb[0].mxu0 %v162
  %v228 = vpop.f32.mrb[0].mxu0
  %v229 = vadd.f32 %v107, %v228
  %v230 = vpop.f32.mrb[0].mxu0
  %v231 = vadd.f32 %v111, %v230
  %v232 = vpop.f32.mrb[0].mxu0
  %v233 = vadd.f32 %v107, %v232
  %v234 = vpop.f32.mrb[0].mxu0
  %v235 = vadd.f32 %v111, %v234
  %236 = vdwg.mxu0
  %237 = vmatprep.subr.bf16.mxu0 0
  %238 = vmatpush1.bf16.msra.mxu0 %v141
  %239 = vmatprep.subr.bf16.mxu0 0
  %240 = vmatpush1.bf16.msra.mxu0 %v144
  %241 = vmatprep.subr.bf16.mxu0 0
  %242 = vmatpush1.bf16.msra.mxu0 0
  %243 = vmatprep.subr.bf16.mxu0 0
  %244 = vmatpush1.bf16.msra.mxu0 0
  %245 = vmatprep.subr.bf16.mxu0 0
  %246 = vmatpush1.bf16.msra.mxu0 0
  %247 = vmatprep.subr.bf16.mxu0 0
  %248 = vmatpush1.bf16.msra.mxu0 0
  %249 = vmatprep.subr.bf16.mxu0 0
  %250 = vmatpush1.bf16.msra.mxu0 0
  %251 = vmatprep.subr.bf16.mxu0 0
  %252 = vmatpush1.bf16.msra.mxu0 0
  %253 = vmatprep.subr.bf16.mxu0 0
  %254 = vmatpush1.bf16.msra.mxu0 0
  %255 = vmatprep.subr.bf16.mxu0 0
  %256 = vmatpush1.bf16.msra.mxu0 0
  %257 = vmatprep.subr.bf16.mxu0 0
  %258 = vmatpush1.bf16.msra.mxu0 0
  %259 = vmatprep.subr.bf16.mxu0 0
  %260 = vmatpush1.bf16.msra.mxu0 0
  %261 = vmatprep.subr.bf16.mxu0 0
  %262 = vmatpush1.bf16.msra.mxu0 0
  %263 = vmatprep.subr.bf16.mxu0 0
  %264 = vmatpush1.bf16.msra.mxu0 0
  %265 = vmatprep.subr.bf16.mxu0 0
  %266 = vmatpush1.bf16.msra.mxu0 0
  %267 = vmatprep.subr.bf16.mxu0 0
  %268 = vmatpush1.bf16.msra.mxu0 0
  %269 = vmatprep.mubr.bf16.mxu0 0
  %270 = vmatmul.mubr.bf16.gmra.mrb[0].mxu0 %v153
  %v271 = vpop.f32.mrb[0].mxu0
  %v272 = vadd.f32 %v115, %v271
  %v273 = vpop.f32.mrb[0].mxu0
  %v274 = vpop.f32.mrb[0].mxu0
  %v275 = vadd.f32 %v115, %v274
  %v276 = vpop.f32.mrb[0].mxu0
  %277 = vmatprep.mubr.bf16.mxu0 0
  %278 = vmatmul.mubr.bf16.gmra.mrb[0].mxu0 %v156
  %v279 = vpop.f32.mrb[0].mxu0
  %v280 = vadd.f32 %v115, %v279
  %v281 = vpop.f32.mrb[0].mxu0
  %v282 = vpop.f32.mrb[0].mxu0
  %v283 = vadd.f32 %v115, %v282
  %v284 = vpop.f32.mrb[0].mxu0
  %285 = vmatprep.mubr.bf16.mxu0 0
  %286 = vmatmul.mubr.bf16.gmra.mrb[0].mxu0 %v159
  %v287 = vpop.f32.mrb[0].mxu0
  %v288 = vadd.f32 %v115, %v287
  %v289 = vpop.f32.mrb[0].mxu0
  %v290 = vpop.f32.mrb[0].mxu0
  %v291 = vadd.f32 %v115, %v290
  %v292 = vpop.f32.mrb[0].mxu0
  %293 = vmatprep.mubr.bf16.mxu0 0
  %294 = vmatmul.mubr.bf16.gmra.mrb[0].mxu0 %v162
  %v295 = vpop.f32.mrb[0].mxu0
  %v296 = vadd.f32 %v115, %v295
  %v297 = vpop.f32.mrb[0].mxu0
  %v298 = vpop.f32.mrb[0].mxu0
  %v299 = vadd.f32 %v115, %v298
  %v300 = vpop.f32.mrb[0].mxu0
  %301 = vdwg.mxu0
  %v302 = vld [vmem:[%s3] sm:$0xff]
  %v303 = vld [vmem:[%s3 + $0x8] sm:$0xf]
  %v304 = vld [vmem:[%s3 + $0xc] sm:$0xff]
  %v305 = vld [vmem:[%s3 + $0x14] sm:$0xf]
  %v306 = vld [vmem:[%s3 + $0x18] sm:$0xff]
  %v307 = vld [vmem:[%s3 + $0x20] sm:$0xf]
  %v308 = vld [vmem:[%s3 + $0x24] sm:$0xff]
  %v309 = vld [vmem:[%s3 + $0x2c] sm:$0xf]
  %v310 = vld [vmem:[%s5] sm:$0x1]
  %v312 = vlaneseq
  %v313 = vshrl.u32 %v312, 7
  %v314 = vsub.s32 0, %v313
  %v315 = vrot.slane %v310, %v314
  %v317 = vld [vmem:[%s1] sm:$0xff]
  %v318 = vpack.c.bf16 %v317, %v317
  %v327 = vunpack.c.l.b16 %v302
  %v328 = vunpack.c.h.b16 %v302
  %v329 = vunpack.c.l.b16 %v303
  %v330 = vunpack.c.l.b16 %v304
  %v331 = vunpack.c.h.b16 %v304
  %v332 = vunpack.c.l.b16 %v305
  %v333 = vunpack.c.l.b16 %v306
  %v334 = vunpack.c.h.b16 %v306
  %v335 = vunpack.c.l.b16 %v307
  %v336 = vunpack.c.l.b16 %v308
  %v337 = vunpack.c.h.b16 %v308
  %v338 = vunpack.c.l.b16 %v309
  %v339 = vpack.c.b16 %v330, %v327
  %v340 = vpack.c.b16 %v331, %v328
  %v341 = vpack.c.b16 %v332, %v329
  %v342 = vpack.c.b16 %v336, %v333
  %v343 = vpack.c.b16 %v337, %v334
  %v344 = vpack.c.b16 %v338, %v335
  %v352 = vsel %vm151, %v318, 0
  %354 = vmatprep.subr.bf16.mxu0 %v340
  %355 = vmatpush1.bf16.msra.mxu0 %v339
  %356 = vmatprep.subr.bf16.mxu0 %v343
  %357 = vmatpush1.bf16.msra.mxu0 %v342
  %358 = vmatprep.subr.bf16.mxu0 0
  %359 = vmatpush1.bf16.msra.mxu0 0
  %360 = vmatprep.subr.bf16.mxu0 0
  %361 = vmatpush1.bf16.msra.mxu0 0
  %362 = vmatprep.subr.bf16.mxu0 0
  %363 = vmatpush1.bf16.msra.mxu0 0
  %364 = vmatprep.subr.bf16.mxu0 0
  %365 = vmatpush1.bf16.msra.mxu0 0
  %366 = vmatprep.subr.bf16.mxu0 0
  %367 = vmatpush1.bf16.msra.mxu0 0
  %368 = vmatprep.subr.bf16.mxu0 0
  %369 = vmatpush1.bf16.msra.mxu0 0
  %370 = vmatprep.subr.bf16.mxu0 0
  %371 = vmatpush1.bf16.msra.mxu0 0
  %372 = vmatprep.subr.bf16.mxu0 0
  %373 = vmatpush1.bf16.msra.mxu0 0
  %374 = vmatprep.subr.bf16.mxu0 0
  %375 = vmatpush1.bf16.msra.mxu0 0
  %376 = vmatprep.subr.bf16.mxu0 0
  %377 = vmatpush1.bf16.msra.mxu0 0
  %378 = vmatprep.subr.bf16.mxu0 0
  %379 = vmatpush1.bf16.msra.mxu0 0
  %380 = vmatprep.subr.bf16.mxu0 0
  %381 = vmatpush1.bf16.msra.mxu0 0
  %382 = vmatprep.subr.bf16.mxu0 0
  %383 = vmatpush1.bf16.msra.mxu0 0
  %384 = vmatprep.subr.bf16.mxu0 0
  %385 = vmatpush1.bf16.msra.mxu0 0
  %386 = vmatprep.mubr.bf16.mxu0 0
  %387 = vmatmul.mubr.bf16.gmra.mrb[0].mxu0 %v352
  %v388 = vpop.f32.mrb[0].mxu0
  %v389 = vadd.f32 0.0, %v388
  %v390 = vpop.f32.mrb[0].mxu0
  %v391 = vadd.f32 0.0, %v390
  %v392 = vpop.f32.mrb[0].mxu0
  %v393 = vpop.f32.mrb[0].mxu0
  %394 = vdwg.mxu0
  %395 = vmatprep.subr.bf16.mxu0 0
  %396 = vmatpush1.bf16.msra.mxu0 %v341
  %397 = vmatprep.subr.bf16.mxu0 0
  %398 = vmatpush1.bf16.msra.mxu0 %v344
  %399 = vmatprep.subr.bf16.mxu0 0
  %400 = vmatpush1.bf16.msra.mxu0 0
  %401 = vmatprep.subr.bf16.mxu0 0
  %402 = vmatpush1.bf16.msra.mxu0 0
  %403 = vmatprep.subr.bf16.mxu0 0
  %404 = vmatpush1.bf16.msra.mxu0 0
  %405 = vmatprep.subr.bf16.mxu0 0
  %406 = vmatpush1.bf16.msra.mxu0 0
  %407 = vmatprep.subr.bf16.mxu0 0
  %408 = vmatpush1.bf16.msra.mxu0 0
  %409 = vmatprep.subr.bf16.mxu0 0
  %410 = vmatpush1.bf16.msra.mxu0 0
  %411 = vmatprep.subr.bf16.mxu0 0
  %412 = vmatpush1.bf16.msra.mxu0 0
  %413 = vmatprep.subr.bf16.mxu0 0
  %414 = vmatpush1.bf16.msra.mxu0 0
  %415 = vmatprep.subr.bf16.mxu0 0
  %416 = vmatpush1.bf16.msra.mxu0 0
  %417 = vmatprep.subr.bf16.mxu0 0
  %418 = vmatpush1.bf16.msra.mxu0 0
  %419 = vmatprep.subr.bf16.mxu0 0
  %420 = vmatpush1.bf16.msra.mxu0 0
  %421 = vmatprep.subr.bf16.mxu0 0
  %422 = vmatpush1.bf16.msra.mxu0 0
  %423 = vmatprep.subr.bf16.mxu0 0
  %424 = vmatpush1.bf16.msra.mxu0 0
  %425 = vmatprep.subr.bf16.mxu0 0
  %426 = vmatpush1.bf16.msra.mxu0 0
  %427 = vmatprep.mubr.bf16.mxu0 0
  %428 = vmatmul.mubr.bf16.gmra.mrb[0].mxu0 %v352
  %v429 = vpop.f32.mrb[0].mxu0
  %v430 = vadd.f32 0.0, %v429
  %v431 = vpop.f32.mrb[0].mxu0
  %v432 = vpop.f32.mrb[0].mxu0
  %v433 = vpop.f32.mrb[0].mxu0
  %434 = vdwg.mxu0
  %v435 = vadd.f32 %v199, %v389
  %v436 = vxor.u32 %v435, 2147483648
  %v437 = vmul.f32 %v436, 1.442695
  %v438 = vpow.pop %v437
  %v439 = vadd.f32 %v438, 1.0
  %v440 = vrcp.pop %v439
  %v441 = vmul.f32 1.0, %v440
  %v442 = vadd.f32 %v201, %v391
  %v443 = vxor.u32 %v442, 2147483648
  %v444 = vmul.f32 %v443, 1.442695
  %v445 = vpow.pop %v444
  %v446 = vadd.f32 %v445, 1.0
  %v447 = vrcp.pop %v446
  %v448 = vmul.f32 1.0, %v447
  %v449 = vadd.f32 %v430, %v315
  %v450 = vmul.f32 %v441, %v449
  %v451 = vadd.f32 %v272, %v450
  %v452 = vtanh.pop %v451
  %v453 = vsub.f32 1.0, %v448
  %v454 = vmul.f32 %v453, %v452
  %v455 = vmul.f32 %v448, %v317
  %v456 = vadd.f32 %v454, %v455
  %457 = vst.msk [vmem:[#allocation2] sm:$0xff] %vm151, %v456
  %v458 = vpack.c.bf16 %v456, %v456
  %v460 = vsel %vm151, %v458, 0
  %462 = vmatprep.subr.bf16.mxu0 %v340
  %463 = vmatpush1.bf16.msra.mxu0 %v339
  %464 = vmatprep.subr.bf16.mxu0 %v343
  %465 = vmatpush1.bf16.msra.mxu0 %v342
  %466 = vmatprep.subr.bf16.mxu0 0
  %467 = vmatpush1.bf16.msra.mxu0 0
  %468 = vmatprep.subr.bf16.mxu0 0
  %469 = vmatpush1.bf16.msra.mxu0 0
  %470 = vmatprep.subr.bf16.mxu0 0
  %471 = vmatpush1.bf16.msra.mxu0 0
  %472 = vmatprep.subr.bf16.mxu0 0
  %473 = vmatpush1.bf16.msra.mxu0 0
  %474 = vmatprep.subr.bf16.mxu0 0
  %475 = vmatpush1.bf16.msra.mxu0 0
  %476 = vmatprep.subr.bf16.mxu0 0
  %477 = vmatpush1.bf16.msra.mxu0 0
  %478 = vmatprep.subr.bf16.mxu0 0
  %479 = vmatpush1.bf16.msra.mxu0 0
  %480 = vmatprep.subr.bf16.mxu0 0
  %481 = vmatpush1.bf16.msra.mxu0 0
  %482 = vmatprep.subr.bf16.mxu0 0
  %483 = vmatpush1.bf16.msra.mxu0 0
  %484 = vmatprep.subr.bf16.mxu0 0
  %485 = vmatpush1.bf16.msra.mxu0 0
  %486 = vmatprep.subr.bf16.mxu0 0
  %487 = vmatpush1.bf16.msra.mxu0 0
  %488 = vmatprep.subr.bf16.mxu0 0
  %489 = vmatpush1.bf16.msra.mxu0 0
  %490 = vmatprep.subr.bf16.mxu0 0
  %491 = vmatpush1.bf16.msra.mxu0 0
  %492 = vmatprep.subr.bf16.mxu0 0
  %493 = vmatpush1.bf16.msra.mxu0 0
  %494 = vmatprep.mubr.bf16.mxu0 0
  %495 = vmatmul.mubr.bf16.gmra.mrb[0].mxu0 %v460
  %v496 = vpop.f32.mrb[0].mxu0
  %v497 = vadd.f32 0.0, %v496
  %v498 = vpop.f32.mrb[0].mxu0
  %v499 = vadd.f32 0.0, %v498
  %v500 = vpop.f32.mrb[0].mxu0
  %v501 = vpop.f32.mrb[0].mxu0
  %502 = vdwg.mxu0
  %503 = vmatprep.subr.bf16.mxu0 0
  %504 = vmatpush1.bf16.msra.mxu0 %v341
  %505 = vmatprep.subr.bf16.mxu0 0
  %506 = vmatpush1.bf16.msra.mxu0 %v344
  %507 = vmatprep.subr.bf16.mxu0 0
  %508 = vmatpush1.bf16.msra.mxu0 0
  %509 = vmatprep.subr.bf16.mxu0 0
  %510 = vmatpush1.bf16.msra.mxu0 0
  %511 = vmatprep.subr.bf16.mxu0 0
  %512 = vmatpush1.bf16.msra.mxu0 0
  %513 = vmatprep.subr.bf16.mxu0 0
  %514 = vmatpush1.bf16.msra.mxu0 0
  %515 = vmatprep.subr.bf16.mxu0 0
  %516 = vmatpush1.bf16.msra.mxu0 0
  %517 = vmatprep.subr.bf16.mxu0 0
  %518 = vmatpush1.bf16.msra.mxu0 0
  %519 = vmatprep.subr.bf16.mxu0 0
  %520 = vmatpush1.bf16.msra.mxu0 0
  %521 = vmatprep.subr.bf16.mxu0 0
  %522 = vmatpush1.bf16.msra.mxu0 0
  %523 = vmatprep.subr.bf16.mxu0 0
  %524 = vmatpush1.bf16.msra.mxu0 0
  %525 = vmatprep.subr.bf16.mxu0 0
  %526 = vmatpush1.bf16.msra.mxu0 0
  %527 = vmatprep.subr.bf16.mxu0 0
  %528 = vmatpush1.bf16.msra.mxu0 0
  %529 = vmatprep.subr.bf16.mxu0 0
  %530 = vmatpush1.bf16.msra.mxu0 0
  %531 = vmatprep.subr.bf16.mxu0 0
  %532 = vmatpush1.bf16.msra.mxu0 0
  %533 = vmatprep.subr.bf16.mxu0 0
  %534 = vmatpush1.bf16.msra.mxu0 0
  %535 = vmatprep.mubr.bf16.mxu0 0
  %536 = vmatmul.mubr.bf16.gmra.mrb[0].mxu0 %v460
  %v537 = vpop.f32.mrb[0].mxu0
  %v538 = vadd.f32 0.0, %v537
  %v539 = vpop.f32.mrb[0].mxu0
  %v540 = vpop.f32.mrb[0].mxu0
  %v541 = vpop.f32.mrb[0].mxu0
  %542 = vdwg.mxu0
  %v543 = vadd.f32 %v203, %v497
  %v544 = vxor.u32 %v543, 2147483648
  %v545 = vmul.f32 %v544, 1.442695
  %v546 = vpow.pop %v545
  %v547 = vadd.f32 %v546, 1.0
  %v548 = vrcp.pop %v547
  %v549 = vmul.f32 1.0, %v548
  %v550 = vadd.f32 %v205, %v499
  %v551 = vxor.u32 %v550, 2147483648
  %v552 = vmul.f32 %v551, 1.442695
  %v553 = vpow.pop %v552
  %v554 = vadd.f32 %v553, 1.0
  %v555 = vrcp.pop %v554
  %v556 = vmul.f32 1.0, %v555
  %v557 = vadd.f32 %v538, %v315
  %v558 = vmul.f32 %v549, %v557
  %v559 = vadd.f32 %v275, %v558
  %v560 = vtanh.pop %v559
  %v561 = vsub.f32 1.0, %v556
  %v562 = vmul.f32 %v561, %v560
  %v563 = vmul.f32 %v556, %v456
  %v564 = vadd.f32 %v562, %v563
  %565 = vst.msk [vmem:[#allocation2 + $0x8] sm:$0xff] %vm151, %v564
  %v566 = vpack.c.bf16 %v564, %v564
  %v568 = vsel %vm151, %v566, 0
  %570 = vmatprep.subr.bf16.mxu0 %v340
  %571 = vmatpush1.bf16.msra.mxu0 %v339
  %572 = vmatprep.subr.bf16.mxu0 %v343
  %573 = vmatpush1.bf16.msra.mxu0 %v342
  %574 = vmatprep.subr.bf16.mxu0 0
  %575 = vmatpush1.bf16.msra.mxu0 0
  %576 = vmatprep.subr.bf16.mxu0 0
  %577 = vmatpush1.bf16.msra.mxu0 0
  %578 = vmatprep.subr.bf16.mxu0 0
  %579 = vmatpush1.bf16.msra.mxu0 0
  %580 = vmatprep.subr.bf16.mxu0 0
  %581 = vmatpush1.bf16.msra.mxu0 0
  %582 = vmatprep.subr.bf16.mxu0 0
  %583 = vmatpush1.bf16.msra.mxu0 0
  %584 = vmatprep.subr.bf16.mxu0 0
  %585 = vmatpush1.bf16.msra.mxu0 0
  %586 = vmatprep.subr.bf16.mxu0 0
  %587 = vmatpush1.bf16.msra.mxu0 0
  %588 = vmatprep.subr.bf16.mxu0 0
  %589 = vmatpush1.bf16.msra.mxu0 0
  %590 = vmatprep.subr.bf16.mxu0 0
  %591 = vmatpush1.bf16.msra.mxu0 0
  %592 = vmatprep.subr.bf16.mxu0 0
  %593 = vmatpush1.bf16.msra.mxu0 0
  %594 = vmatprep.subr.bf16.mxu0 0
  %595 = vmatpush1.bf16.msra.mxu0 0
  %596 = vmatprep.subr.bf16.mxu0 0
  %597 = vmatpush1.bf16.msra.mxu0 0
  %598 = vmatprep.subr.bf16.mxu0 0
  %599 = vmatpush1.bf16.msra.mxu0 0
  %600 = vmatprep.subr.bf16.mxu0 0
  %601 = vmatpush1.bf16.msra.mxu0 0
  %602 = vmatprep.mubr.bf16.mxu0 0
  %603 = vmatmul.mubr.bf16.gmra.mrb[0].mxu0 %v568
  %v604 = vpop.f32.mrb[0].mxu0
  %v605 = vadd.f32 0.0, %v604
  %v606 = vpop.f32.mrb[0].mxu0
  %v607 = vadd.f32 0.0, %v606
  %v608 = vpop.f32.mrb[0].mxu0
  %v609 = vpop.f32.mrb[0].mxu0
  %610 = vdwg.mxu0
  %611 = vmatprep.subr.bf16.mxu0 0
  %612 = vmatpush1.bf16.msra.mxu0 %v341
  %613 = vmatprep.subr.bf16.mxu0 0
  %614 = vmatpush1.bf16.msra.mxu0 %v344
  %615 = vmatprep.subr.bf16.mxu0 0
  %616 = vmatpush1.bf16.msra.mxu0 0
  %617 = vmatprep.subr.bf16.mxu0 0
  %618 = vmatpush1.bf16.msra.mxu0 0
  %619 = vmatprep.subr.bf16.mxu0 0
  %620 = vmatpush1.bf16.msra.mxu0 0
  %621 = vmatprep.subr.bf16.mxu0 0
  %622 = vmatpush1.bf16.msra.mxu0 0
  %623 = vmatprep.subr.bf16.mxu0 0
  %624 = vmatpush1.bf16.msra.mxu0 0
  %625 = vmatprep.subr.bf16.mxu0 0
  %626 = vmatpush1.bf16.msra.mxu0 0
  %627 = vmatprep.subr.bf16.mxu0 0
  %628 = vmatpush1.bf16.msra.mxu0 0
  %629 = vmatprep.subr.bf16.mxu0 0
  %630 = vmatpush1.bf16.msra.mxu0 0
  %631 = vmatprep.subr.bf16.mxu0 0
  %632 = vmatpush1.bf16.msra.mxu0 0
  %633 = vmatprep.subr.bf16.mxu0 0
  %634 = vmatpush1.bf16.msra.mxu0 0
  %635 = vmatprep.subr.bf16.mxu0 0
  %636 = vmatpush1.bf16.msra.mxu0 0
  %637 = vmatprep.subr.bf16.mxu0 0
  %638 = vmatpush1.bf16.msra.mxu0 0
  %639 = vmatprep.subr.bf16.mxu0 0
  %640 = vmatpush1.bf16.msra.mxu0 0
  %641 = vmatprep.subr.bf16.mxu0 0
  %642 = vmatpush1.bf16.msra.mxu0 0
  %643 = vmatprep.mubr.bf16.mxu0 0
  %644 = vmatmul.mubr.bf16.gmra.mrb[0].mxu0 %v568
  %v645 = vpop.f32.mrb[0].mxu0
  %v646 = vadd.f32 0.0, %v645
  %v647 = vpop.f32.mrb[0].mxu0
  %v648 = vpop.f32.mrb[0].mxu0
  %v649 = vpop.f32.mrb[0].mxu0
  %650 = vdwg.mxu0
  %v651 = vadd.f32 %v209, %v605
  %v652 = vxor.u32 %v651, 2147483648
  %v653 = vmul.f32 %v652, 1.442695
  %v654 = vpow.pop %v653
  %v655 = vadd.f32 %v654, 1.0
  %v656 = vrcp.pop %v655
  %v657 = vmul.f32 1.0, %v656
  %v658 = vadd.f32 %v211, %v607
  %v659 = vxor.u32 %v658, 2147483648
  %v660 = vmul.f32 %v659, 1.442695
  %v661 = vpow.pop %v660
  %v662 = vadd.f32 %v661, 1.0
  %v663 = vrcp.pop %v662
  %v664 = vmul.f32 1.0, %v663
  %v665 = vadd.f32 %v646, %v315
  %v666 = vmul.f32 %v657, %v665
  %v667 = vadd.f32 %v280, %v666
  %v668 = vtanh.pop %v667
  %v669 = vsub.f32 1.0, %v664
  %v670 = vmul.f32 %v669, %v668
  %v671 = vmul.f32 %v664, %v564
  %v672 = vadd.f32 %v670, %v671
  %673 = vst.msk [vmem:[#allocation2 + $0x10] sm:$0xff] %vm151, %v672
  %v674 = vpack.c.bf16 %v672, %v672
  %v676 = vsel %vm151, %v674, 0
  %678 = vmatprep.subr.bf16.mxu0 %v340
  %679 = vmatpush1.bf16.msra.mxu0 %v339
  %680 = vmatprep.subr.bf16.mxu0 %v343
  %681 = vmatpush1.bf16.msra.mxu0 %v342
  %682 = vmatprep.subr.bf16.mxu0 0
  %683 = vmatpush1.bf16.msra.mxu0 0
  %684 = vmatprep.subr.bf16.mxu0 0
  %685 = vmatpush1.bf16.msra.mxu0 0
  %686 = vmatprep.subr.bf16.mxu0 0
  %687 = vmatpush1.bf16.msra.mxu0 0
  %688 = vmatprep.subr.bf16.mxu0 0
  %689 = vmatpush1.bf16.msra.mxu0 0
  %690 = vmatprep.subr.bf16.mxu0 0
  %691 = vmatpush1.bf16.msra.mxu0 0
  %692 = vmatprep.subr.bf16.mxu0 0
  %693 = vmatpush1.bf16.msra.mxu0 0
  %694 = vmatprep.subr.bf16.mxu0 0
  %695 = vmatpush1.bf16.msra.mxu0 0
  %696 = vmatprep.subr.bf16.mxu0 0
  %697 = vmatpush1.bf16.msra.mxu0 0
  %698 = vmatprep.subr.bf16.mxu0 0
  %699 = vmatpush1.bf16.msra.mxu0 0
  %700 = vmatprep.subr.bf16.mxu0 0
  %701 = vmatpush1.bf16.msra.mxu0 0
  %702 = vmatprep.subr.bf16.mxu0 0
  %703 = vmatpush1.bf16.msra.mxu0 0
  %704 = vmatprep.subr.bf16.mxu0 0
  %705 = vmatpush1.bf16.msra.mxu0 0
  %706 = vmatprep.subr.bf16.mxu0 0
  %707 = vmatpush1.bf16.msra.mxu0 0
  %708 = vmatprep.subr.bf16.mxu0 0
  %709 = vmatpush1.bf16.msra.mxu0 0
  %710 = vmatprep.mubr.bf16.mxu0 0
  %711 = vmatmul.mubr.bf16.gmra.mrb[0].mxu0 %v676
  %v712 = vpop.f32.mrb[0].mxu0
  %v713 = vadd.f32 0.0, %v712
  %v714 = vpop.f32.mrb[0].mxu0
  %v715 = vadd.f32 0.0, %v714
  %v716 = vpop.f32.mrb[0].mxu0
  %v717 = vpop.f32.mrb[0].mxu0
  %718 = vdwg.mxu0
  %719 = vmatprep.subr.bf16.mxu0 0
  %720 = vmatpush1.bf16.msra.mxu0 %v341
  %721 = vmatprep.subr.bf16.mxu0 0
  %722 = vmatpush1.bf16.msra.mxu0 %v344
  %723 = vmatprep.subr.bf16.mxu0 0
  %724 = vmatpush1.bf16.msra.mxu0 0
  %725 = vmatprep.subr.bf16.mxu0 0
  %726 = vmatpush1.bf16.msra.mxu0 0
  %727 = vmatprep.subr.bf16.mxu0 0
  %728 = vmatpush1.bf16.msra.mxu0 0
  %729 = vmatprep.subr.bf16.mxu0 0
  %730 = vmatpush1.bf16.msra.mxu0 0
  %731 = vmatprep.subr.bf16.mxu0 0
  %732 = vmatpush1.bf16.msra.mxu0 0
  %733 = vmatprep.subr.bf16.mxu0 0
  %734 = vmatpush1.bf16.msra.mxu0 0
  %735 = vmatprep.subr.bf16.mxu0 0
  %736 = vmatpush1.bf16.msra.mxu0 0
  %737 = vmatprep.subr.bf16.mxu0 0
  %738 = vmatpush1.bf16.msra.mxu0 0
  %739 = vmatprep.subr.bf16.mxu0 0
  %740 = vmatpush1.bf16.msra.mxu0 0
  %741 = vmatprep.subr.bf16.mxu0 0
  %742 = vmatpush1.bf16.msra.mxu0 0
  %743 = vmatprep.subr.bf16.mxu0 0
  %744 = vmatpush1.bf16.msra.mxu0 0
  %745 = vmatprep.subr.bf16.mxu0 0
  %746 = vmatpush1.bf16.msra.mxu0 0
  %747 = vmatprep.subr.bf16.mxu0 0
  %748 = vmatpush1.bf16.msra.mxu0 0
  %749 = vmatprep.subr.bf16.mxu0 0
  %750 = vmatpush1.bf16.msra.mxu0 0
  %751 = vmatprep.mubr.bf16.mxu0 0
  %752 = vmatmul.mubr.bf16.gmra.mrb[0].mxu0 %v676
  %v753 = vpop.f32.mrb[0].mxu0
  %v754 = vadd.f32 0.0, %v753
  %v755 = vpop.f32.mrb[0].mxu0
  %v756 = vpop.f32.mrb[0].mxu0
  %v757 = vpop.f32.mrb[0].mxu0
  %758 = vdwg.mxu0
  %v759 = vadd.f32 %v213, %v713
  %v760 = vxor.u32 %v759, 2147483648
  %v761 = vmul.f32 %v760, 1.442695
  %v762 = vpow.pop %v761
  %v763 = vadd.f32 %v762, 1.0
  %v764 = vrcp.pop %v763
  %v765 = vmul.f32 1.0, %v764
  %v766 = vadd.f32 %v215, %v715
  %v767 = vxor.u32 %v766, 2147483648
  %v768 = vmul.f32 %v767, 1.442695
  %v769 = vpow.pop %v768
  %v770 = vadd.f32 %v769, 1.0
  %v771 = vrcp.pop %v770
  %v772 = vmul.f32 1.0, %v771
  %v773 = vadd.f32 %v754, %v315
  %v774 = vmul.f32 %v765, %v773
  %v775 = vadd.f32 %v283, %v774
  %v776 = vtanh.pop %v775
  %v777 = vsub.f32 1.0, %v772
  %v778 = vmul.f32 %v777, %v776
  %v779 = vmul.f32 %v772, %v672
  %v780 = vadd.f32 %v778, %v779
  %781 = vst.msk [vmem:[#allocation2 + $0x18] sm:$0xff] %vm151, %v780
  %v782 = vpack.c.bf16 %v780, %v780
  %v784 = vsel %vm151, %v782, 0
  %786 = vmatprep.subr.bf16.mxu0 %v340
  %787 = vmatpush1.bf16.msra.mxu0 %v339
  %788 = vmatprep.subr.bf16.mxu0 %v343
  %789 = vmatpush1.bf16.msra.mxu0 %v342
  %790 = vmatprep.subr.bf16.mxu0 0
  %791 = vmatpush1.bf16.msra.mxu0 0
  %792 = vmatprep.subr.bf16.mxu0 0
  %793 = vmatpush1.bf16.msra.mxu0 0
  %794 = vmatprep.subr.bf16.mxu0 0
  %795 = vmatpush1.bf16.msra.mxu0 0
  %796 = vmatprep.subr.bf16.mxu0 0
  %797 = vmatpush1.bf16.msra.mxu0 0
  %798 = vmatprep.subr.bf16.mxu0 0
  %799 = vmatpush1.bf16.msra.mxu0 0
  %800 = vmatprep.subr.bf16.mxu0 0
  %801 = vmatpush1.bf16.msra.mxu0 0
  %802 = vmatprep.subr.bf16.mxu0 0
  %803 = vmatpush1.bf16.msra.mxu0 0
  %804 = vmatprep.subr.bf16.mxu0 0
  %805 = vmatpush1.bf16.msra.mxu0 0
  %806 = vmatprep.subr.bf16.mxu0 0
  %807 = vmatpush1.bf16.msra.mxu0 0
  %808 = vmatprep.subr.bf16.mxu0 0
  %809 = vmatpush1.bf16.msra.mxu0 0
  %810 = vmatprep.subr.bf16.mxu0 0
  %811 = vmatpush1.bf16.msra.mxu0 0
  %812 = vmatprep.subr.bf16.mxu0 0
  %813 = vmatpush1.bf16.msra.mxu0 0
  %814 = vmatprep.subr.bf16.mxu0 0
  %815 = vmatpush1.bf16.msra.mxu0 0
  %816 = vmatprep.subr.bf16.mxu0 0
  %817 = vmatpush1.bf16.msra.mxu0 0
  %818 = vmatprep.mubr.bf16.mxu0 0
  %819 = vmatmul.mubr.bf16.gmra.mrb[0].mxu0 %v784
  %v820 = vpop.f32.mrb[0].mxu0
  %v821 = vadd.f32 0.0, %v820
  %v822 = vpop.f32.mrb[0].mxu0
  %v823 = vadd.f32 0.0, %v822
  %v824 = vpop.f32.mrb[0].mxu0
  %v825 = vpop.f32.mrb[0].mxu0
  %826 = vdwg.mxu0
  %827 = vmatprep.subr.bf16.mxu0 0
  %828 = vmatpush1.bf16.msra.mxu0 %v341
  %829 = vmatprep.subr.bf16.mxu0 0
  %830 = vmatpush1.bf16.msra.mxu0 %v344
  %831 = vmatprep.subr.bf16.mxu0 0
  %832 = vmatpush1.bf16.msra.mxu0 0
  %833 = vmatprep.subr.bf16.mxu0 0
  %834 = vmatpush1.bf16.msra.mxu0 0
  %835 = vmatprep.subr.bf16.mxu0 0
  %836 = vmatpush1.bf16.msra.mxu0 0
  %837 = vmatprep.subr.bf16.mxu0 0
  %838 = vmatpush1.bf16.msra.mxu0 0
  %839 = vmatprep.subr.bf16.mxu0 0
  %840 = vmatpush1.bf16.msra.mxu0 0
  %841 = vmatprep.subr.bf16.mxu0 0
  %842 = vmatpush1.bf16.msra.mxu0 0
  %843 = vmatprep.subr.bf16.mxu0 0
  %844 = vmatpush1.bf16.msra.mxu0 0
  %845 = vmatprep.subr.bf16.mxu0 0
  %846 = vmatpush1.bf16.msra.mxu0 0
  %847 = vmatprep.subr.bf16.mxu0 0
  %848 = vmatpush1.bf16.msra.mxu0 0
  %849 = vmatprep.subr.bf16.mxu0 0
  %850 = vmatpush1.bf16.msra.mxu0 0
  %851 = vmatprep.subr.bf16.mxu0 0
  %852 = vmatpush1.bf16.msra.mxu0 0
  %853 = vmatprep.subr.bf16.mxu0 0
  %854 = vmatpush1.bf16.msra.mxu0 0
  %855 = vmatprep.subr.bf16.mxu0 0
  %856 = vmatpush1.bf16.msra.mxu0 0
  %857 = vmatprep.subr.bf16.mxu0 0
  %858 = vmatpush1.bf16.msra.mxu0 0
  %859 = vmatprep.mubr.bf16.mxu0 0
  %860 = vmatmul.mubr.bf16.gmra.mrb[0].mxu0 %v784
  %v861 = vpop.f32.mrb[0].mxu0
  %v862 = vadd.f32 0.0, %v861
  %v863 = vpop.f32.mrb[0].mxu0
  %v864 = vpop.f32.mrb[0].mxu0
  %v865 = vpop.f32.mrb[0].mxu0
  %866 = vdwg.mxu0
  %v867 = vadd.f32 %v219, %v821
  %v868 = vxor.u32 %v867, 2147483648
  %v869 = vmul.f32 %v868, 1.442695
  %v870 = vpow.pop %v869
  %v871 = vadd.f32 %v870, 1.0
  %v872 = vrcp.pop %v871
  %v873 = vmul.f32 1.0, %v872
  %v874 = vadd.f32 %v221, %v823
  %v875 = vxor.u32 %v874, 2147483648
  %v876 = vmul.f32 %v875, 1.442695
  %v877 = vpow.pop %v876
  %v878 = vadd.f32 %v877, 1.0
  %v879 = vrcp.pop %v878
  %v880 = vmul.f32 1.0, %v879
  %v881 = vadd.f32 %v862, %v315
  %v882 = vmul.f32 %v873, %v881
  %v883 = vadd.f32 %v288, %v882
  %v884 = vtanh.pop %v883
  %v885 = vsub.f32 1.0, %v880
  %v886 = vmul.f32 %v885, %v884
  %v887 = vmul.f32 %v880, %v780
  %v888 = vadd.f32 %v886, %v887
  %889 = vst.msk [vmem:[#allocation2 + $0x20] sm:$0xff] %vm151, %v888
  %v890 = vpack.c.bf16 %v888, %v888
  %v892 = vsel %vm151, %v890, 0
  %894 = vmatprep.subr.bf16.mxu0 %v340
  %895 = vmatpush1.bf16.msra.mxu0 %v339
  %896 = vmatprep.subr.bf16.mxu0 %v343
  %897 = vmatpush1.bf16.msra.mxu0 %v342
  %898 = vmatprep.subr.bf16.mxu0 0
  %899 = vmatpush1.bf16.msra.mxu0 0
  %900 = vmatprep.subr.bf16.mxu0 0
  %901 = vmatpush1.bf16.msra.mxu0 0
  %902 = vmatprep.subr.bf16.mxu0 0
  %903 = vmatpush1.bf16.msra.mxu0 0
  %904 = vmatprep.subr.bf16.mxu0 0
  %905 = vmatpush1.bf16.msra.mxu0 0
  %906 = vmatprep.subr.bf16.mxu0 0
  %907 = vmatpush1.bf16.msra.mxu0 0
  %908 = vmatprep.subr.bf16.mxu0 0
  %909 = vmatpush1.bf16.msra.mxu0 0
  %910 = vmatprep.subr.bf16.mxu0 0
  %911 = vmatpush1.bf16.msra.mxu0 0
  %912 = vmatprep.subr.bf16.mxu0 0
  %913 = vmatpush1.bf16.msra.mxu0 0
  %914 = vmatprep.subr.bf16.mxu0 0
  %915 = vmatpush1.bf16.msra.mxu0 0
  %916 = vmatprep.subr.bf16.mxu0 0
  %917 = vmatpush1.bf16.msra.mxu0 0
  %918 = vmatprep.subr.bf16.mxu0 0
  %919 = vmatpush1.bf16.msra.mxu0 0
  %920 = vmatprep.subr.bf16.mxu0 0
  %921 = vmatpush1.bf16.msra.mxu0 0
  %922 = vmatprep.subr.bf16.mxu0 0
  %923 = vmatpush1.bf16.msra.mxu0 0
  %924 = vmatprep.subr.bf16.mxu0 0
  %925 = vmatpush1.bf16.msra.mxu0 0
  %926 = vmatprep.mubr.bf16.mxu0 0
  %927 = vmatmul.mubr.bf16.gmra.mrb[0].mxu0 %v892
  %v928 = vpop.f32.mrb[0].mxu0
  %v929 = vadd.f32 0.0, %v928
  %v930 = vpop.f32.mrb[0].mxu0
  %v931 = vadd.f32 0.0, %v930
  %v932 = vpop.f32.mrb[0].mxu0
  %v933 = vpop.f32.mrb[0].mxu0
  %934 = vdwg.mxu0
  %935 = vmatprep.subr.bf16.mxu0 0
  %936 = vmatpush1.bf16.msra.mxu0 %v341
  %937 = vmatprep.subr.bf16.mxu0 0
  %938 = vmatpush1.bf16.msra.mxu0 %v344
  %939 = vmatprep.subr.bf16.mxu0 0
  %940 = vmatpush1.bf16.msra.mxu0 0
  %941 = vmatprep.subr.bf16.mxu0 0
  %942 = vmatpush1.bf16.msra.mxu0 0
  %943 = vmatprep.subr.bf16.mxu0 0
  %944 = vmatpush1.bf16.msra.mxu0 0
  %945 = vmatprep.subr.bf16.mxu0 0
  %946 = vmatpush1.bf16.msra.mxu0 0
  %947 = vmatprep.subr.bf16.mxu0 0
  %948 = vmatpush1.bf16.msra.mxu0 0
  %949 = vmatprep.subr.bf16.mxu0 0
  %950 = vmatpush1.bf16.msra.mxu0 0
  %951 = vmatprep.subr.bf16.mxu0 0
  %952 = vmatpush1.bf16.msra.mxu0 0
  %953 = vmatprep.subr.bf16.mxu0 0
  %954 = vmatpush1.bf16.msra.mxu0 0
  %955 = vmatprep.subr.bf16.mxu0 0
  %956 = vmatpush1.bf16.msra.mxu0 0
  %957 = vmatprep.subr.bf16.mxu0 0
  %958 = vmatpush1.bf16.msra.mxu0 0
  %959 = vmatprep.subr.bf16.mxu0 0
  %960 = vmatpush1.bf16.msra.mxu0 0
  %961 = vmatprep.subr.bf16.mxu0 0
  %962 = vmatpush1.bf16.msra.mxu0 0
  %963 = vmatprep.subr.bf16.mxu0 0
  %964 = vmatpush1.bf16.msra.mxu0 0
  %965 = vmatprep.subr.bf16.mxu0 0
  %966 = vmatpush1.bf16.msra.mxu0 0
  %967 = vmatprep.mubr.bf16.mxu0 0
  %968 = vmatmul.mubr.bf16.gmra.mrb[0].mxu0 %v892
  %v969 = vpop.f32.mrb[0].mxu0
  %v970 = vadd.f32 0.0, %v969
  %v971 = vpop.f32.mrb[0].mxu0
  %v972 = vpop.f32.mrb[0].mxu0
  %v973 = vpop.f32.mrb[0].mxu0
  %974 = vdwg.mxu0
  %v975 = vadd.f32 %v223, %v929
  %v976 = vxor.u32 %v975, 2147483648
  %v977 = vmul.f32 %v976, 1.442695
  %v978 = vpow.pop %v977
  %v979 = vadd.f32 %v978, 1.0
  %v980 = vrcp.pop %v979
  %v981 = vmul.f32 1.0, %v980
  %v982 = vadd.f32 %v225, %v931
  %v983 = vxor.u32 %v982, 2147483648
  %v984 = vmul.f32 %v983, 1.442695
  %v985 = vpow.pop %v984
  %v986 = vadd.f32 %v985, 1.0
  %v987 = vrcp.pop %v986
  %v988 = vmul.f32 1.0, %v987
  %v989 = vadd.f32 %v970, %v315
  %v990 = vmul.f32 %v981, %v989
  %v991 = vadd.f32 %v291, %v990
  %v992 = vtanh.pop %v991
  %v993 = vsub.f32 1.0, %v988
  %v994 = vmul.f32 %v993, %v992
  %v995 = vmul.f32 %v988, %v888
  %v996 = vadd.f32 %v994, %v995
  %997 = vst.msk [vmem:[#allocation2 + $0x28] sm:$0xff] %vm151, %v996
  %v998 = vpack.c.bf16 %v996, %v996
  %v1000 = vsel %vm151, %v998, 0
  %1002 = vmatprep.subr.bf16.mxu0 %v340
  %1003 = vmatpush1.bf16.msra.mxu0 %v339
  %1004 = vmatprep.subr.bf16.mxu0 %v343
  %1005 = vmatpush1.bf16.msra.mxu0 %v342
  %1006 = vmatprep.subr.bf16.mxu0 0
  %1007 = vmatpush1.bf16.msra.mxu0 0
  %1008 = vmatprep.subr.bf16.mxu0 0
  %1009 = vmatpush1.bf16.msra.mxu0 0
  %1010 = vmatprep.subr.bf16.mxu0 0
  %1011 = vmatpush1.bf16.msra.mxu0 0
  %1012 = vmatprep.subr.bf16.mxu0 0
  %1013 = vmatpush1.bf16.msra.mxu0 0
  %1014 = vmatprep.subr.bf16.mxu0 0
  %1015 = vmatpush1.bf16.msra.mxu0 0
  %1016 = vmatprep.subr.bf16.mxu0 0
  %1017 = vmatpush1.bf16.msra.mxu0 0
  %1018 = vmatprep.subr.bf16.mxu0 0
  %1019 = vmatpush1.bf16.msra.mxu0 0
  %1020 = vmatprep.subr.bf16.mxu0 0
  %1021 = vmatpush1.bf16.msra.mxu0 0
  %1022 = vmatprep.subr.bf16.mxu0 0
  %1023 = vmatpush1.bf16.msra.mxu0 0
  %1024 = vmatprep.subr.bf16.mxu0 0
  %1025 = vmatpush1.bf16.msra.mxu0 0
  %1026 = vmatprep.subr.bf16.mxu0 0
  %1027 = vmatpush1.bf16.msra.mxu0 0
  %1028 = vmatprep.subr.bf16.mxu0 0
  %1029 = vmatpush1.bf16.msra.mxu0 0
  %1030 = vmatprep.subr.bf16.mxu0 0
  %1031 = vmatpush1.bf16.msra.mxu0 0
  %1032 = vmatprep.subr.bf16.mxu0 0
  %1033 = vmatpush1.bf16.msra.mxu0 0
  %1034 = vmatprep.mubr.bf16.mxu0 0
  %1035 = vmatmul.mubr.bf16.gmra.mrb[0].mxu0 %v1000
  %v1036 = vpop.f32.mrb[0].mxu0
  %v1037 = vadd.f32 0.0, %v1036
  %v1038 = vpop.f32.mrb[0].mxu0
  %v1039 = vadd.f32 0.0, %v1038
  %v1040 = vpop.f32.mrb[0].mxu0
  %v1041 = vpop.f32.mrb[0].mxu0
  %1042 = vdwg.mxu0
  %1043 = vmatprep.subr.bf16.mxu0 0
  %1044 = vmatpush1.bf16.msra.mxu0 %v341
  %1045 = vmatprep.subr.bf16.mxu0 0
  %1046 = vmatpush1.bf16.msra.mxu0 %v344
  %1047 = vmatprep.subr.bf16.mxu0 0
  %1048 = vmatpush1.bf16.msra.mxu0 0
  %1049 = vmatprep.subr.bf16.mxu0 0
  %1050 = vmatpush1.bf16.msra.mxu0 0
  %1051 = vmatprep.subr.bf16.mxu0 0
  %1052 = vmatpush1.bf16.msra.mxu0 0
  %1053 = vmatprep.subr.bf16.mxu0 0
  %1054 = vmatpush1.bf16.msra.mxu0 0
  %1055 = vmatprep.subr.bf16.mxu0 0
  %1056 = vmatpush1.bf16.msra.mxu0 0
  %1057 = vmatprep.subr.bf16.mxu0 0
  %1058 = vmatpush1.bf16.msra.mxu0 0
  %1059 = vmatprep.subr.bf16.mxu0 0
  %1060 = vmatpush1.bf16.msra.mxu0 0
  %1061 = vmatprep.subr.bf16.mxu0 0
  %1062 = vmatpush1.bf16.msra.mxu0 0
  %1063 = vmatprep.subr.bf16.mxu0 0
  %1064 = vmatpush1.bf16.msra.mxu0 0
  %1065 = vmatprep.subr.bf16.mxu0 0
  %1066 = vmatpush1.bf16.msra.mxu0 0
  %1067 = vmatprep.subr.bf16.mxu0 0
  %1068 = vmatpush1.bf16.msra.mxu0 0
  %1069 = vmatprep.subr.bf16.mxu0 0
  %1070 = vmatpush1.bf16.msra.mxu0 0
  %1071 = vmatprep.subr.bf16.mxu0 0
  %1072 = vmatpush1.bf16.msra.mxu0 0
  %1073 = vmatprep.subr.bf16.mxu0 0
  %1074 = vmatpush1.bf16.msra.mxu0 0
  %1075 = vmatprep.mubr.bf16.mxu0 0
  %1076 = vmatmul.mubr.bf16.gmra.mrb[0].mxu0 %v1000
  %v1077 = vpop.f32.mrb[0].mxu0
  %v1078 = vadd.f32 0.0, %v1077
  %v1079 = vpop.f32.mrb[0].mxu0
  %v1080 = vpop.f32.mrb[0].mxu0
  %v1081 = vpop.f32.mrb[0].mxu0
  %1082 = vdwg.mxu0
  %v1083 = vadd.f32 %v229, %v1037
  %v1084 = vxor.u32 %v1083, 2147483648
  %v1085 = vmul.f32 %v1084, 1.442695
  %v1086 = vpow.pop %v1085
  %v1087 = vadd.f32 %v1086, 1.0
  %v1088 = vrcp.pop %v1087
  %v1089 = vmul.f32 1.0, %v1088
  %v1090 = vadd.f32 %v231, %v1039
  %v1091 = vxor.u32 %v1090, 2147483648
  %v1092 = vmul.f32 %v1091, 1.442695
  %v1093 = vpow.pop %v1092
  %v1094 = vadd.f32 %v1093, 1.0
  %v1095 = vrcp.pop %v1094
  %v1096 = vmul.f32 1.0, %v1095
  %v1097 = vadd.f32 %v1078, %v315
  %v1098 = vmul.f32 %v1089, %v1097
  %v1099 = vadd.f32 %v296, %v1098
  %v1100 = vtanh.pop %v1099
  %v1101 = vsub.f32 1.0, %v1096
  %v1102 = vmul.f32 %v1101, %v1100
  %v1103 = vmul.f32 %v1096, %v996
  %v1104 = vadd.f32 %v1102, %v1103
  %1105 = vst.msk [vmem:[#allocation2 + $0x30] sm:$0xff] %vm151, %v1104
  %v1106 = vpack.c.bf16 %v1104, %v1104
  %v1108 = vsel %vm151, %v1106, 0
  %1110 = vmatprep.subr.bf16.mxu0 %v340
  %1111 = vmatpush1.bf16.msra.mxu0 %v339
  %1112 = vmatprep.subr.bf16.mxu0 %v343
  %1113 = vmatpush1.bf16.msra.mxu0 %v342
  %1114 = vmatprep.subr.bf16.mxu0 0
  %1115 = vmatpush1.bf16.msra.mxu0 0
  %1116 = vmatprep.subr.bf16.mxu0 0
  %1117 = vmatpush1.bf16.msra.mxu0 0
  %1118 = vmatprep.subr.bf16.mxu0 0
  %1119 = vmatpush1.bf16.msra.mxu0 0
  %1120 = vmatprep.subr.bf16.mxu0 0
  %1121 = vmatpush1.bf16.msra.mxu0 0
  %1122 = vmatprep.subr.bf16.mxu0 0
  %1123 = vmatpush1.bf16.msra.mxu0 0
  %1124 = vmatprep.subr.bf16.mxu0 0
  %1125 = vmatpush1.bf16.msra.mxu0 0
  %1126 = vmatprep.subr.bf16.mxu0 0
  %1127 = vmatpush1.bf16.msra.mxu0 0
  %1128 = vmatprep.subr.bf16.mxu0 0
  %1129 = vmatpush1.bf16.msra.mxu0 0
  %1130 = vmatprep.subr.bf16.mxu0 0
  %1131 = vmatpush1.bf16.msra.mxu0 0
  %1132 = vmatprep.subr.bf16.mxu0 0
  %1133 = vmatpush1.bf16.msra.mxu0 0
  %1134 = vmatprep.subr.bf16.mxu0 0
  %1135 = vmatpush1.bf16.msra.mxu0 0
  %1136 = vmatprep.subr.bf16.mxu0 0
  %1137 = vmatpush1.bf16.msra.mxu0 0
  %1138 = vmatprep.subr.bf16.mxu0 0
  %1139 = vmatpush1.bf16.msra.mxu0 0
  %1140 = vmatprep.subr.bf16.mxu0 0
  %1141 = vmatpush1.bf16.msra.mxu0 0
  %1142 = vmatprep.mubr.bf16.mxu0 0
  %1143 = vmatmul.mubr.bf16.gmra.mrb[0].mxu0 %v1108
  %v1144 = vpop.f32.mrb[0].mxu0
  %v1145 = vadd.f32 0.0, %v1144
  %v1146 = vpop.f32.mrb[0].mxu0
  %v1147 = vadd.f32 0.0, %v1146
  %v1148 = vpop.f32.mrb[0].mxu0
  %v1149 = vpop.f32.mrb[0].mxu0
  %1150 = vdwg.mxu0
  %1151 = vmatprep.subr.bf16.mxu0 0
  %1152 = vmatpush1.bf16.msra.mxu0 %v341
  %1153 = vmatprep.subr.bf16.mxu0 0
  %1154 = vmatpush1.bf16.msra.mxu0 %v344
  %1155 = vmatprep.subr.bf16.mxu0 0
  %1156 = vmatpush1.bf16.msra.mxu0 0
  %1157 = vmatprep.subr.bf16.mxu0 0
  %1158 = vmatpush1.bf16.msra.mxu0 0
  %1159 = vmatprep.subr.bf16.mxu0 0
  %1160 = vmatpush1.bf16.msra.mxu0 0
  %1161 = vmatprep.subr.bf16.mxu0 0
  %1162 = vmatpush1.bf16.msra.mxu0 0
  %1163 = vmatprep.subr.bf16.mxu0 0
  %1164 = vmatpush1.bf16.msra.mxu0 0
  %1165 = vmatprep.subr.bf16.mxu0 0
  %1166 = vmatpush1.bf16.msra.mxu0 0
  %1167 = vmatprep.subr.bf16.mxu0 0
  %1168 = vmatpush1.bf16.msra.mxu0 0
  %1169 = vmatprep.subr.bf16.mxu0 0
  %1170 = vmatpush1.bf16.msra.mxu0 0
  %1171 = vmatprep.subr.bf16.mxu0 0
  %1172 = vmatpush1.bf16.msra.mxu0 0
  %1173 = vmatprep.subr.bf16.mxu0 0
  %1174 = vmatpush1.bf16.msra.mxu0 0
  %1175 = vmatprep.subr.bf16.mxu0 0
  %1176 = vmatpush1.bf16.msra.mxu0 0
  %1177 = vmatprep.subr.bf16.mxu0 0
  %1178 = vmatpush1.bf16.msra.mxu0 0
  %1179 = vmatprep.subr.bf16.mxu0 0
  %1180 = vmatpush1.bf16.msra.mxu0 0
  %1181 = vmatprep.subr.bf16.mxu0 0
  %1182 = vmatpush1.bf16.msra.mxu0 0
  %1183 = vmatprep.mubr.bf16.mxu0 0
  %1184 = vmatmul.mubr.bf16.gmra.mrb[0].mxu0 %v1108
  %v1185 = vpop.f32.mrb[0].mxu0
  %v1186 = vadd.f32 0.0, %v1185
  %v1187 = vpop.f32.mrb[0].mxu0
  %v1188 = vpop.f32.mrb[0].mxu0
  %v1189 = vpop.f32.mrb[0].mxu0
  %1190 = vdwg.mxu0
  %v1191 = vadd.f32 %v233, %v1145
  %v1192 = vxor.u32 %v1191, 2147483648
  %v1193 = vmul.f32 %v1192, 1.442695
  %v1194 = vpow.pop %v1193
  %v1195 = vadd.f32 %v1194, 1.0
  %v1196 = vrcp.pop %v1195
  %v1197 = vmul.f32 1.0, %v1196
  %v1198 = vadd.f32 %v235, %v1147
  %v1199 = vxor.u32 %v1198, 2147483648
  %v1200 = vmul.f32 %v1199, 1.442695
  %v1201 = vpow.pop %v1200
  %v1202 = vadd.f32 %v1201, 1.0
  %v1203 = vrcp.pop %v1202
  %v1204 = vmul.f32 1.0, %v1203
  %v1205 = vadd.f32 %v1186, %v315
  %v1206 = vmul.f32 %v1197, %v1205
  %v1207 = vadd.f32 %v299, %v1206
  %v1208 = vtanh.pop %v1207
  %v1209 = vsub.f32 1.0, %v1204
  %v1210 = vmul.f32 %v1209, %v1208
  %v1211 = vmul.f32 %v1204, %v1104
  %v1212 = vadd.f32 %v1210, %v1211
  %1213 = vst.msk [vmem:[#allocation2 + $0x38] sm:$0xff] %vm151, %v1212
  %1214 = vst.msk [vmem:[%s9] sm:$0xff] %vm151, %v1212
  %v1215 = vld [vmem:[#allocation2] sm:$0xff]
  %v1216 = vld [vmem:[#allocation2 + $0x8] sm:$0xff]
  %v1217 = vld [vmem:[#allocation2 + $0x10] sm:$0xff]
  %v1218 = vld [vmem:[#allocation2 + $0x18] sm:$0xff]
  %v1219 = vld [vmem:[#allocation2 + $0x20] sm:$0xff]
  %v1220 = vld [vmem:[#allocation2 + $0x28] sm:$0xff]
  %v1221 = vld [vmem:[#allocation2 + $0x30] sm:$0xff]
  %v1222 = vld [vmem:[#allocation2 + $0x38] sm:$0xff]
  %v1223 = vpack.c.bf16 %v1216, %v1215
  %v1224 = vpack.c.bf16 %v1218, %v1217
  %v1225 = vpack.c.bf16 %v1220, %v1219
  %v1226 = vpack.c.bf16 %v1222, %v1221
  %v1227 = vld [vmem:[%s6] sm:$0xf]
  %v1228 = vld [vmem:[%s6 + $0x4] sm:$0xf]
  %v1229 = vld [vmem:[%s6 + $0x8] sm:$0xf]
  %v1230 = vld [vmem:[%s6 + $0xc] sm:$0xf]
  %v1231 = vld [vmem:[%s7] sm:$0x1]
  %v1233 = vlaneseq
  %v1234 = vshrl.u32 %v1233, 7
  %v1235 = vsub.s32 0, %v1234
  %v1236 = vrot.slane %v1231, %v1235
  %v1242 = vunpack.c.l.b16 %v1227
  %v1243 = vunpack.c.l.b16 %v1228
  %v1244 = vunpack.c.l.b16 %v1229
  %v1245 = vunpack.c.l.b16 %v1230
  %v1246 = vpack.c.b16 %v1243, %v1242
  %v1247 = vpack.c.b16 %v1245, %v1244
  %v1251 = vsel %vm151, %v1223, 0
  %v1254 = vsel %vm151, %v1224, 0
  %v1257 = vsel %vm151, %v1225, 0
  %v1260 = vsel %vm151, %v1226, 0
  %1262 = vmatprep.subr.bf16.mxu0 0
  %1263 = vmatpush1.bf16.msra.mxu0 %v1246
  %1264 = vmatprep.subr.bf16.mxu0 0
  %1265 = vmatpush1.bf16.msra.mxu0 %v1247
  %1266 = vmatprep.subr.bf16.mxu0 0
  %1267 = vmatpush1.bf16.msra.mxu0 0
  %1268 = vmatprep.subr.bf16.mxu0 0
  %1269 = vmatpush1.bf16.msra.mxu0 0
  %1270 = vmatprep.subr.bf16.mxu0 0
  %1271 = vmatpush1.bf16.msra.mxu0 0
  %1272 = vmatprep.subr.bf16.mxu0 0
  %1273 = vmatpush1.bf16.msra.mxu0 0
  %1274 = vmatprep.subr.bf16.mxu0 0
  %1275 = vmatpush1.bf16.msra.mxu0 0
  %1276 = vmatprep.subr.bf16.mxu0 0
  %1277 = vmatpush1.bf16.msra.mxu0 0
  %1278 = vmatprep.subr.bf16.mxu0 0
  %1279 = vmatpush1.bf16.msra.mxu0 0
  %1280 = vmatprep.subr.bf16.mxu0 0
  %1281 = vmatpush1.bf16.msra.mxu0 0
  %1282 = vmatprep.subr.bf16.mxu0 0
  %1283 = vmatpush1.bf16.msra.mxu0 0
  %1284 = vmatprep.subr.bf16.mxu0 0
  %1285 = vmatpush1.bf16.msra.mxu0 0
  %1286 = vmatprep.subr.bf16.mxu0 0
  %1287 = vmatpush1.bf16.msra.mxu0 0
  %1288 = vmatprep.subr.bf16.mxu0 0
  %1289 = vmatpush1.bf16.msra.mxu0 0
  %1290 = vmatprep.subr.bf16.mxu0 0
  %1291 = vmatpush1.bf16.msra.mxu0 0
  %1292 = vmatprep.subr.bf16.mxu0 0
  %1293 = vmatpush1.bf16.msra.mxu0 0
  %1294 = vmatprep.mubr.bf16.mxu0 0
  %1295 = vmatmul.mubr.bf16.gmra.mrb[0].mxu0 %v1251
  %v1296 = vpop.f32.mrb[0].mxu0
  %v1297 = vadd.f32 %v1236, %v1296
  %v1298 = vpop.f32.mrb[0].mxu0
  %v1299 = vpop.f32.mrb[0].mxu0
  %v1300 = vadd.f32 %v1236, %v1299
  %v1301 = vpop.f32.mrb[0].mxu0
  %1302 = vmatprep.mubr.bf16.mxu0 0
  %1303 = vmatmul.mubr.bf16.gmra.mrb[0].mxu0 %v1254
  %v1304 = vpop.f32.mrb[0].mxu0
  %v1305 = vadd.f32 %v1236, %v1304
  %v1306 = vpop.f32.mrb[0].mxu0
  %v1307 = vpop.f32.mrb[0].mxu0
  %v1308 = vadd.f32 %v1236, %v1307
  %v1309 = vpop.f32.mrb[0].mxu0
  %1310 = vmatprep.mubr.bf16.mxu0 0
  %1311 = vmatmul.mubr.bf16.gmra.mrb[0].mxu0 %v1257
  %v1312 = vpop.f32.mrb[0].mxu0
  %v1313 = vadd.f32 %v1236, %v1312
  %v1314 = vpop.f32.mrb[0].mxu0
  %v1315 = vpop.f32.mrb[0].mxu0
  %v1316 = vadd.f32 %v1236, %v1315
  %v1317 = vpop.f32.mrb[0].mxu0
  %1318 = vmatprep.mubr.bf16.mxu0 0
  %1319 = vmatmul.mubr.bf16.gmra.mrb[0].mxu0 %v1260
  %v1320 = vpop.f32.mrb[0].mxu0
  %v1321 = vadd.f32 %v1236, %v1320
  %v1322 = vpop.f32.mrb[0].mxu0
  %v1323 = vpop.f32.mrb[0].mxu0
  %v1324 = vadd.f32 %v1236, %v1323
  %v1325 = vpop.f32.mrb[0].mxu0
  %1326 = vdwg.mxu0
  %1327 = vst.msk [vmem:[%s8] sm:$0xff] %vm151, %v1297
  %1328 = vst.msk [vmem:[%s8 + $0x8] sm:$0xff] %vm151, %v1300
  %1329 = vst.msk [vmem:[%s8 + $0x10] sm:$0xff] %vm151, %v1305
  %1330 = vst.msk [vmem:[%s8 + $0x18] sm:$0xff] %vm151, %v1308
  %1331 = vst.msk [vmem:[%s8 + $0x20] sm:$0xff] %vm151, %v1313
  %1332 = vst.msk [vmem:[%s8 + $0x28] sm:$0xff] %vm151, %v1316
  %1333 = vst.msk [vmem:[%s8 + $0x30] sm:$0xff] %vm151, %v1321
  %1334 = vst.msk [vmem:[%s8 + $0x38] sm:$0xff] %vm151, %v1324
  // Predicated region
  $region34: #{decoder_forward.1} parent=0 // pred_check
    _
  $region35: #{decoder_forward.1} parent=0 // pred_check_branch
    %1336 = sbr.rel (0) target = $region37
  $region36: #{decoder_forward.1} parent=0 // pred_region
    _
  $region37: #{decoder_forward.1} parent=0 // pred_fallthru
    _
  // Predicated region
  $region38: #{decoder_forward.1} parent=0 // pred_check
    _
  $region39: #{decoder_forward.1} parent=0 // pred_check_branch
    %1338 = sbr.rel (0) target = $region41
  $region40: #{decoder_forward.1} parent=0 // pred_region
    _
  $region41: #{decoder_forward.1} parent=0 // pred_fallthru
    _
  // Predicated region
  $region42: #{decoder_forward.1} parent=0 // pred_check
    _
  $region43: #{decoder_forward.1} parent=0 // pred_check_branch
    %1340 = sbr.rel (0) target = $region45
  $region44: #{decoder_forward.1} parent=0 // pred_region
    _
  $region45: #{decoder_forward.1} parent=0 // pred_fallthru
    _
  // Predicated region
  $region46: #{decoder_forward.1} parent=0 // pred_check
    _
  $region47: #{decoder_forward.1} parent=0 // pred_check_branch
    %1342 = sbr.rel (0) target = $region49
  $region48: #{decoder_forward.1} parent=0 // pred_region
    _
  $region49: #{decoder_forward.1} parent=0 // pred_fallthru
    _

</llo_original>
